<compile_context>
chip_gen: v7x
topology: tpu7x:2x2x1
jax: 0.10.0
libtpu: 0.0.40
codegen_flags: <defaults>
</compile_context>

<pallas_src>
import functools

import jax
import jax.numpy as jnp
from jax.experimental import pallas as pl
from jax.experimental.pallas import tpu as pltpu


def _round_up(n, m):
    return ((n + m - 1) // m) * m


def _softplus(x):
    # single-branch numerically-stable softplus: max(x,0) + log1p(exp(-|x|))
    return jnp.maximum(x, 0.0) + jnp.log1p(jnp.exp(-jnp.abs(x)))


def vae_forward_kernel(x_ref, eps_ref,
                       we_ref, be_ref,
                       wh_ref, bh_ref,
                       wd1_ref, bd1_ref,
                       wd2_ref, bd2_ref,
                       packed_ref, xrec_ref,
                       *, z_dim, lane_pad):
    f32 = jnp.float32
    bf16 = jnp.bfloat16

    # ---- encode: h = relu(x @ We + be) ---- (bf16 MXU inputs, f32 accumulate)
    h = jnp.dot(x_ref[...], we_ref[...], preferred_element_type=f32) + be_ref[...]
    h = jnp.maximum(h, 0.0)

    # ---- fused component heads: one (H, 2Z) matmul == per-component Linear + concat ----
    head = jnp.dot(h.astype(bf16), wh_ref[...], preferred_element_type=f32) + bh_ref[...]
    mu = head[:, :z_dim]
    sigma = _softplus(head[:, z_dim:])

    # ---- rsample_with_parts: z = mu + sigma * eps ----
    # TODO(synk): eps could be drawn in-kernel (pltpu.prng_seed + stateful_normal)
    # to drop this HBM stream; kept as an input for exact reference verification.
    z = mu + sigma * eps_ref[...]

    # ---- decode: relu(z @ Wd1 + bd1) @ Wd2 + bd2 ----
    h2 = jnp.dot(z.astype(bf16), wd1_ref[...], preferred_element_type=f32) + bd1_ref[...]
    h2 = jnp.maximum(h2, 0.0)
    xrec = jnp.dot(h2.astype(bf16), wd2_ref[...], preferred_element_type=f32) + bd2_ref[...]

    # ---- lane-dense packed writeback: [mu | sigma | z | pad] in one 128-multiple slab ----
    parts = [mu, sigma, z]
    if lane_pad:
        parts.append(jnp.zeros((mu.shape[0], lane_pad), f32))
    packed_ref[...] = jnp.concatenate(parts, axis=-1)
    xrec_ref[...] = xrec


def _pack_params(params):
    """Stack per-component heads and cast matmul weights to bf16."""
    bf16 = jnp.bfloat16
    w_heads = jnp.concatenate([params["wmu"], params["wsig"]], axis=1)
    b_heads = jnp.concatenate([params["bmu"], params["bsig"]], axis=1)
    return dict(
        we=params["we"].astype(bf16), be=params["be"].astype(jnp.float32),
        wh=w_heads.astype(bf16),      bh=b_heads.astype(jnp.float32),
        wd1=params["wd1"].astype(bf16), bd1=params["bd1"].astype(jnp.float32),
        wd2=params["wd2"].astype(bf16), bd2=params["bd2"].astype(jnp.float32),
    )


def model_vae_forward(x, eps, params, *, block_b=512):
    """Fused VAE forward. Returns (mu, sigma, concat_z, x_) — all f32."""
    B, D_in = x.shape
    Z = eps.shape[-1]
    p = _pack_params(params)

    # ---- batch tiling (pad tail so the grid covers B exactly) ----
    if B <= block_b:
        TB = _round_up(B, 8)
        Bp = TB
    else:
        TB = _round_up(block_b, 8)
        Bp = _round_up(B, TB)

    x_bf = x.astype(jnp.bfloat16)           # halve the input HBM stream
    eps_f = eps.astype(jnp.float32)
    if Bp != B:
        x_bf = jnp.pad(x_bf, ((0, Bp - B), (0, 0)))
        eps_f = jnp.pad(eps_f, ((0, Bp - B), (0, 0)))

    # packed head output width, padded to a lane-dense multiple of 128
    P = _round_up(3 * Z, 128)
    lane_pad = P - 3 * Z

    kernel = functools.partial(vae_forward_kernel, z_dim=Z, lane_pad=lane_pad)

    def full_spec(shape):
        # weights/biases: full array resident in VMEM across all grid steps
        return pl.BlockSpec(shape, lambda i: (0,) * len(shape))

    in_specs = [
        pl.BlockSpec((TB, D_in), lambda i: (i, 0)),   # x tile
        pl.BlockSpec((TB, Z),    lambda i: (i, 0)),   # eps tile
        full_spec(p["we"].shape),  full_spec(p["be"].shape),
        full_spec(p["wh"].shape),  full_spec(p["bh"].shape),
        full_spec(p["wd1"].shape), full_spec(p["bd1"].shape),
        full_spec(p["wd2"].shape), full_spec(p["bd2"].shape),
    ]
    out_specs = (
        pl.BlockSpec((TB, P),    lambda i: (i, 0)),   # packed [mu|sigma|z|pad]
        pl.BlockSpec((TB, D_in), lambda i: (i, 0)),   # xrec logits
    )
    out_shape = (
        jax.ShapeDtypeStruct((Bp, P), jnp.float32),
        jax.ShapeDtypeStruct((Bp, D_in), jnp.float32),
    )

    packed, xrec = pl.pallas_call(
        kernel,
        grid=(Bp // TB,),
        in_specs=in_specs,
        out_specs=out_specs,
        out_shape=out_shape,
        compiler_params=pltpu.CompilerParams(
            # batch axis is embarrassingly parallel -> megacore sharding on v7x
            dimension_semantics=("parallel",),
            # conservative budget (fits v7x's 64 MiB physical VMEM with headroom)
            vmem_limit_bytes=32 << 20,
        ),
    )(x_bf, eps_f,
      p["we"], p["be"], p["wh"], p["bh"],
      p["wd1"], p["bd1"], p["wd2"], p["bd2"])

    mu = packed[:B, 0:Z]
    sigma = packed[:B, Z:2 * Z]
    z = packed[:B, 2 * Z:3 * Z]
    return mu, sigma, z, xrec[:B]


def model_vae_forward_ref(x, eps, params):
    """Pure-JAX reference with identical (bf16-input, f32-accumulate) math."""
    p = _pack_params(params)
    Z = eps.shape[-1]
    bf16, f32 = jnp.bfloat16, jnp.float32
    h = jnp.maximum(
        jnp.dot(x.astype(bf16), p["we"], preferred_element_type=f32) + p["be"], 0.0)
    head = jnp.dot(h.astype(bf16), p["wh"], preferred_element_type=f32) + p["bh"]
    mu = head[:, :Z]
    sigma = _softplus(head[:, Z:])
    z = mu + sigma * eps
    h2 = jnp.maximum(
        jnp.dot(z.astype(bf16), p["wd1"], preferred_element_type=f32) + p["bd1"], 0.0)
    xrec = jnp.dot(h2.astype(bf16), p["wd2"], preferred_element_type=f32) + p["bd2"]
    return mu, sigma, z, xrec


def init_params(key, d_in, h_dim, component_dims):
    """Deterministic synthetic parameters (ModelVAE.__init__ / component.init_layers)."""
    total_z = sum(component_dims)
    ks = jax.random.split(key, 5)

    def lin(k, fan_in, fan_out):
        w = jax.random.normal(k, (fan_in, fan_out), jnp.float32) / jnp.sqrt(fan_in)
        b = jnp.zeros((1, fan_out), jnp.float32)  # biases kept 2D for TPU layout
        return w, b

    we, be = lin(ks[0], d_in, h_dim)
    # per-component heads stacked along output dim (== concat of component outputs)
    wmu, bmu = lin(ks[1], h_dim, total_z)
    wsig, bsig = lin(ks[2], h_dim, total_z)
    wd1, bd1 = lin(ks[3], total_z, h_dim)
    wd2, bd2 = lin(ks[4], h_dim, d_in)
    return dict(we=we, be=be, wmu=wmu, bmu=bmu, wsig=wsig, bsig=bsig,
                wd1=wd1, bd1=bd1, wd2=wd2, bd2=bd2)


if __name__ == "__main__":
    # Small, module-consistent shapes; batch large enough to exercise the grid.
    B = 256          # batch (streamed through the grid in TB-row tiles)
    D_IN = 128       # flattened input features
    H_DIM = 64       # h_dim
    COMPONENT_DIMS = [8, 8, 16]   # three Euclidean components; total_z_dim = 32
    TOTAL_Z = sum(COMPONENT_DIMS)

    key = jax.random.PRNGKey(0)
    k_x, k_eps, k_p = jax.random.split(key, 3)

    x = jax.random.normal(k_x, (B, D_IN), jnp.float32)
    eps = jax.random.normal(k_eps, (B, TOTAL_Z), jnp.float32)
    params = init_params(k_p, D_IN, H_DIM, COMPONENT_DIMS)

    mu, sigma, concat_z, x_rec = jax.block_until_ready(
        model_vae_forward(x, eps, params, block_b=128))

    mu_r, sigma_r, z_r, xrec_r = model_vae_forward_ref(x, eps, params)

    assert mu.shape == (B, TOTAL_Z)
    assert sigma.shape == (B, TOTAL_Z)
    assert concat_z.shape == (B, TOTAL_Z)
    assert x_rec.shape == x.shape          # mirrors `assert x_mb_.shape == x_mb.shape`

    for got, want in ((mu, mu_r), (sigma, sigma_r), (concat_z, z_r), (x_rec, xrec_r)):
        assert jnp.allclose(got, want, atol=1e-3, rtol=1e-3), "mismatch vs reference"

    print("KERNEL_OK")
</pallas_src>

<mosaic_0001>
module attributes {stable_mosaic.version = 11 : i64} {
  func.func @vae_forward_kernel(%arg0: i32, %arg1: memref<128x128xbf16, #tpu.memory_space<vmem>>, %arg2: memref<128x32xf32, #tpu.memory_space<vmem>>, %arg3: memref<128x64xbf16, #tpu.memory_space<vmem>>, %arg4: memref<1x64xf32, #tpu.memory_space<vmem>>, %arg5: memref<64x64xbf16, #tpu.memory_space<vmem>>, %arg6: memref<1x64xf32, #tpu.memory_space<vmem>>, %arg7: memref<32x64xbf16, #tpu.memory_space<vmem>>, %arg8: memref<1x64xf32, #tpu.memory_space<vmem>>, %arg9: memref<64x128xbf16, #tpu.memory_space<vmem>>, %arg10: memref<1x128xf32, #tpu.memory_space<vmem>>, %arg11: memref<128x128xf32, #tpu.memory_space<vmem>>, %arg12: memref<128x128xf32, #tpu.memory_space<vmem>>) attributes {dimension_semantics = [#tpu.dimension_semantics<parallel>], iteration_bounds = array<i64: 2>, scalar_prefetch = 0 : i64, scratch_operands = 0 : i64, tpu.core_type = #tpu.core_type<tc>, window_params = [{transform_indices = @transform_0, window_bounds = array<i64: 128, 128>}, {transform_indices = @transform_1, window_bounds = array<i64: 128, 32>}, {pipeline_mode = #tpu.pipeline_mode<synchronous>, transform_indices = @transform_2, window_bounds = array<i64: 128, 64>}, {pipeline_mode = #tpu.pipeline_mode<synchronous>, transform_indices = @transform_3, window_bounds = array<i64: 1, 64>}, {pipeline_mode = #tpu.pipeline_mode<synchronous>, transform_indices = @transform_4, window_bounds = array<i64: 64, 64>}, {pipeline_mode = #tpu.pipeline_mode<synchronous>, transform_indices = @transform_5, window_bounds = array<i64: 1, 64>}, {pipeline_mode = #tpu.pipeline_mode<synchronous>, transform_indices = @transform_6, window_bounds = array<i64: 32, 64>}, {pipeline_mode = #tpu.pipeline_mode<synchronous>, transform_indices = @transform_7, window_bounds = array<i64: 1, 64>}, {pipeline_mode = #tpu.pipeline_mode<synchronous>, transform_indices = @transform_8, window_bounds = array<i64: 64, 128>}, {pipeline_mode = #tpu.pipeline_mode<synchronous>, transform_indices = @transform_9, window_bounds = array<i64: 1, 128>}, {transform_indices = @transform_10, window_bounds = array<i64: 128, 128>}, {transform_indices = @transform_11, window_bounds = array<i64: 128, 128>}]} {
    %c0 = arith.constant 0 : index
    %c0_0 = arith.constant 0 : index
    %0 = vector.load %arg1[%c0, %c0_0] : memref<128x128xbf16, #tpu.memory_space<vmem>>, vector<128x128xbf16>
    %c0_1 = arith.constant 0 : index
    %c0_2 = arith.constant 0 : index
    %1 = vector.load %arg3[%c0_1, %c0_2] : memref<128x64xbf16, #tpu.memory_space<vmem>>, vector<128x64xbf16>
    %cst = arith.constant dense<0.000000e+00> : vector<128x64xf32>
    %2 = tpu.matmul %0, %1, %cst {dimension_numbers = #tpu.dot_dimension_numbers<[1], [0], [0], [1], [0, 0, 1, 1], [], []>} : vector<128x128xbf16>, vector<128x64xbf16>, vector<128x64xf32> -> vector<128x64xf32>
    %c0_3 = arith.constant 0 : index
    %c0_4 = arith.constant 0 : index
    %3 = vector.load %arg4[%c0_3, %c0_4] : memref<1x64xf32, #tpu.memory_space<vmem>>, vector<1x64xf32>
    %4 = vector.broadcast %3 : vector<1x64xf32> to vector<128x64xf32>
    %5 = arith.addf %2, %4 : vector<128x64xf32>
    %cst_5 = arith.constant 0.000000e+00 : f32
    %6 = vector.broadcast %cst_5 : f32 to vector<128x64xf32>
    %7 = arith.maximumf %5, %6 : vector<128x64xf32>
    %8 = arith.truncf %7 : vector<128x64xf32> to vector<128x64xbf16>
    %c0_6 = arith.constant 0 : index
    %c0_7 = arith.constant 0 : index
    %9 = vector.load %arg5[%c0_6, %c0_7] : memref<64x64xbf16, #tpu.memory_space<vmem>>, vector<64x64xbf16>
    %cst_8 = arith.constant dense<0.000000e+00> : vector<128x64xf32>
    %10 = tpu.matmul %8, %9, %cst_8 {dimension_numbers = #tpu.dot_dimension_numbers<[1], [0], [0], [1], [0, 0, 1, 1], [], []>} : vector<128x64xbf16>, vector<64x64xbf16>, vector<128x64xf32> -> vector<128x64xf32>
    %c0_9 = arith.constant 0 : index
    %c0_10 = arith.constant 0 : index
    %11 = vector.load %arg6[%c0_9, %c0_10] : memref<1x64xf32, #tpu.memory_space<vmem>>, vector<1x64xf32>
    %12 = vector.broadcast %11 : vector<1x64xf32> to vector<128x64xf32>
    %13 = arith.addf %10, %12 : vector<128x64xf32>
    %14 = vector.extract_strided_slice %13 {offsets = [0, 0], sizes = [128, 32], strides = [1, 1]} : vector<128x64xf32> to vector<128x32xf32>
    %15 = vector.extract_strided_slice %13 {offsets = [0, 32], sizes = [128, 32], strides = [1, 1]} : vector<128x64xf32> to vector<128x32xf32>
    %cst_11 = arith.constant 0.000000e+00 : f32
    %16 = vector.broadcast %cst_11 : f32 to vector<128x32xf32>
    %17 = arith.maximumf %15, %16 : vector<128x32xf32>
    %18 = math.absf %15 : vector<128x32xf32>
    %cst_12 = arith.constant 0.000000e+00 : f32
    %19 = vector.broadcast %cst_12 : f32 to vector<128x32xf32>
    %20 = arith.subf %19, %18 : vector<128x32xf32>
    %21 = math.exp %20 : vector<128x32xf32>
    %22 = math.log1p %21 : vector<128x32xf32>
    %23 = arith.addf %17, %22 : vector<128x32xf32>
    %c0_13 = arith.constant 0 : index
    %c0_14 = arith.constant 0 : index
    %24 = vector.load %arg2[%c0_13, %c0_14] : memref<128x32xf32, #tpu.memory_space<vmem>>, vector<128x32xf32>
    %25 = arith.mulf %23, %24 : vector<128x32xf32>
    %26 = arith.addf %14, %25 : vector<128x32xf32>
    %27 = arith.truncf %26 : vector<128x32xf32> to vector<128x32xbf16>
    %c0_15 = arith.constant 0 : index
    %c0_16 = arith.constant 0 : index
    %28 = vector.load %arg7[%c0_15, %c0_16] : memref<32x64xbf16, #tpu.memory_space<vmem>>, vector<32x64xbf16>
    %cst_17 = arith.constant dense<0.000000e+00> : vector<128x64xf32>
    %29 = tpu.matmul %27, %28, %cst_17 {dimension_numbers = #tpu.dot_dimension_numbers<[1], [0], [0], [1], [0, 0, 1, 1], [], []>} : vector<128x32xbf16>, vector<32x64xbf16>, vector<128x64xf32> -> vector<128x64xf32>
    %c0_18 = arith.constant 0 : index
    %c0_19 = arith.constant 0 : index
    %30 = vector.load %arg8[%c0_18, %c0_19] : memref<1x64xf32, #tpu.memory_space<vmem>>, vector<1x64xf32>
    %31 = vector.broadcast %30 : vector<1x64xf32> to vector<128x64xf32>
    %32 = arith.addf %29, %31 : vector<128x64xf32>
    %cst_20 = arith.constant 0.000000e+00 : f32
    %33 = vector.broadcast %cst_20 : f32 to vector<128x64xf32>
    %34 = arith.maximumf %32, %33 : vector<128x64xf32>
    %35 = arith.truncf %34 : vector<128x64xf32> to vector<128x64xbf16>
    %c0_21 = arith.constant 0 : index
    %c0_22 = arith.constant 0 : index
    %36 = vector.load %arg9[%c0_21, %c0_22] : memref<64x128xbf16, #tpu.memory_space<vmem>>, vector<64x128xbf16>
    %cst_23 = arith.constant dense<0.000000e+00> : vector<128x128xf32>
    %37 = tpu.matmul %35, %36, %cst_23 {dimension_numbers = #tpu.dot_dimension_numbers<[1], [0], [0], [1], [0, 0, 1, 1], [], []>} : vector<128x64xbf16>, vector<64x128xbf16>, vector<128x128xf32> -> vector<128x128xf32>
    %c0_24 = arith.constant 0 : index
    %c0_25 = arith.constant 0 : index
    %38 = vector.load %arg10[%c0_24, %c0_25] : memref<1x128xf32, #tpu.memory_space<vmem>>, vector<1x128xf32>
    %39 = vector.broadcast %38 : vector<1x128xf32> to vector<128x128xf32>
    %40 = arith.addf %37, %39 : vector<128x128xf32>
    %cst_26 = arith.constant 0.000000e+00 : f32
    %41 = vector.broadcast %cst_26 : f32 to vector<128x32xf32>
    %42 = tpu.concatenate %14, %23, %26, %41 in 1 : vector<128x32xf32>, vector<128x32xf32>, vector<128x32xf32>, vector<128x32xf32> -> vector<128x128xf32>
    %c0_27 = arith.constant 0 : index
    %c0_28 = arith.constant 0 : index
    %43 = vector.load %arg11[%c0_27, %c0_28] : memref<128x128xf32, #tpu.memory_space<vmem>>, vector<128x128xf32>
    tpu.vector_store %arg11[%c0_27, %c0_28], %42 {strides = array<i32>} : memref<128x128xf32, #tpu.memory_space<vmem>>, vector<128x128xf32>,
    %c0_29 = arith.constant 0 : index
    %c0_30 = arith.constant 0 : index
    %44 = vector.load %arg12[%c0_29, %c0_30] : memref<128x128xf32, #tpu.memory_space<vmem>>, vector<128x128xf32>
    tpu.vector_store %arg12[%c0_29, %c0_30], %40 {strides = array<i32>} : memref<128x128xf32, #tpu.memory_space<vmem>>, vector<128x128xf32>,
    return
  }
  func.func @transform_0(%arg0: i32) -> (i32, i32) {
    %c0_i32 = arith.constant 0 : i32
    %c0_i32_0 = arith.constant 0 : i32
    return %arg0, %c0_i32 : i32, i32
  }
  func.func @transform_1(%arg0: i32) -> (i32, i32) {
    %c0_i32 = arith.constant 0 : i32
    %c0_i32_0 = arith.constant 0 : i32
    return %arg0, %c0_i32 : i32, i32
  }
  func.func @transform_2(%arg0: i32) -> (i32, i32) {
    %c0_i32 = arith.constant 0 : i32
    %c0_i32_0 = arith.constant 0 : i32
    %c0_i32_1 = arith.constant 0 : i32
    return %c0_i32, %c0_i32_0 : i32, i32
  }
  func.func @transform_3(%arg0: i32) -> (i32, i32) {
    %c0_i32 = arith.constant 0 : i32
    %c0_i32_0 = arith.constant 0 : i32
    %c0_i32_1 = arith.constant 0 : i32
    return %c0_i32, %c0_i32_0 : i32, i32
  }
  func.func @transform_4(%arg0: i32) -> (i32, i32) {
    %c0_i32 = arith.constant 0 : i32
    %c0_i32_0 = arith.constant 0 : i32
    %c0_i32_1 = arith.constant 0 : i32
    return %c0_i32, %c0_i32_0 : i32, i32
  }
  func.func @transform_5(%arg0: i32) -> (i32, i32) {
    %c0_i32 = arith.constant 0 : i32
    %c0_i32_0 = arith.constant 0 : i32
    %c0_i32_1 = arith.constant 0 : i32
    return %c0_i32, %c0_i32_0 : i32, i32
  }
  func.func @transform_6(%arg0: i32) -> (i32, i32) {
    %c0_i32 = arith.constant 0 : i32
    %c0_i32_0 = arith.constant 0 : i32
    %c0_i32_1 = arith.constant 0 : i32
    return %c0_i32, %c0_i32_0 : i32, i32
  }
  func.func @transform_7(%arg0: i32) -> (i32, i32) {
    %c0_i32 = arith.constant 0 : i32
    %c0_i32_0 = arith.constant 0 : i32
    %c0_i32_1 = arith.constant 0 : i32
    return %c0_i32, %c0_i32_0 : i32, i32
  }
  func.func @transform_8(%arg0: i32) -> (i32, i32) {
    %c0_i32 = arith.constant 0 : i32
    %c0_i32_0 = arith.constant 0 : i32
    %c0_i32_1 = arith.constant 0 : i32
    return %c0_i32, %c0_i32_0 : i32, i32
  }
  func.func @transform_9(%arg0: i32) -> (i32, i32) {
    %c0_i32 = arith.constant 0 : i32
    %c0_i32_0 = arith.constant 0 : i32
    %c0_i32_1 = arith.constant 0 : i32
    return %c0_i32, %c0_i32_0 : i32, i32
  }
  func.func @transform_10(%arg0: i32) -> (i32, i32) {
    %c0_i32 = arith.constant 0 : i32
    %c0_i32_0 = arith.constant 0 : i32
    return %arg0, %c0_i32 : i32, i32
  }
  func.func @transform_11(%arg0: i32) -> (i32, i32) {
    %c0_i32 = arith.constant 0 : i32
    %c0_i32_0 = arith.constant 0 : i32
    return %arg0, %c0_i32 : i32, i32
  }
}

</mosaic_0001>

<llo_original>
// kernel: tpu_custom_call.1
$region0: #{tpu_custom_call.1}
  #allocation0 [shape = 'u32[]', space=smem, size = 0x4, offset = 0x4, fixed_abs, tag = 'smem constant byte address 0x4 - core index']
  #allocation1 [shape = 'u32[144,128]{1,0:T(1,128)}', space=vmem, size = 0x12000, scoped, tag = 'internal scratch']
  %s0 = inlined_call_operand.vmem [shape: bf16[256,128], index: 0, kind: input, shape index: {}]
  %s1 = inlined_call_operand.vmem [shape: f32[256,32], index: 1, kind: input, shape index: {}]
  %s2 = inlined_call_operand.vmem [shape: bf16[128,64], index: 2, kind: input, shape index: {}]
  %s3 = inlined_call_operand.vmem [shape: f32[1,64], index: 3, kind: input, shape index: {}]
  %s4 = inlined_call_operand.vmem [shape: bf16[64,64], index: 4, kind: input, shape index: {}]
  %s5 = inlined_call_operand.vmem [shape: f32[1,64], index: 5, kind: input, shape index: {}]
  %s6 = inlined_call_operand.vmem [shape: bf16[32,64], index: 6, kind: input, shape index: {}]
  %s7 = inlined_call_operand.vmem [shape: f32[1,64], index: 7, kind: input, shape index: {}]
  %s8 = inlined_call_operand.vmem [shape: bf16[64,128], index: 8, kind: input, shape index: {}]
  %s9 = inlined_call_operand.vmem [shape: f32[1,128], index: 9, kind: input, shape index: {}]
  %s10 = inlined_call_operand.hbm [shape: f32[256,128], index: 10, kind: output, shape index: {0}]
  %s11 = inlined_call_operand.hbm [shape: f32[256,128], index: 11, kind: output, shape index: {1}]
  %12 = xla_tuple %s10, %s11
  %s13 = sld [smem:[#allocation0]]
  $region81: #{tpu_custom_call.1} parent=0
    _
  %s15 = ssub.s32 1, %s13
  %s16 = scalar_select 0, %s15, %s13
  $region1: #{tpu_custom_call.1} parent=0
    #allocation2 [shape = 'u8[131072]{0}', space=vmem, size = 0x20000, scoped, tag = 'output window, operand 0']
    #allocation3 [shape = 's32[2]{0}', space=sflag, size = 0x8, scoped, tag = 'scoped memory for tpu_custom_call.1']
    #allocation4 [shape = 'u8[131072]{0}', space=vmem, size = 0x20000, scoped, tag = 'output window, operand 1']
    #allocation5 [shape = 's32[2]{0}', space=sflag, size = 0x8, scoped, tag = 'scoped memory for tpu_custom_call.1']
    %17 = vsyncpa [#allocation3], 0
    %s18 = scalar_lea.sflag [#allocation3], 1
    %19 = vsyncpa %s18, 0
    %20 = vsyncpa [#allocation5], 0
    %s21 = scalar_lea.sflag [#allocation5], 1
    %22 = vsyncpa %s21, 0
    loop: start=0, step=1, limit=4
    $region2: #{tpu_custom_call.1} parent=1 // loop_pre_header
      _
    $region3: #{tpu_custom_call.1} parent=1 // loop_header
      %s24 = sphi 0, %s28
      %p25 = scmp.ge.s32.totalorder %s24, 4
      %s34 = sphi 0, %s36
      %s37 = sphi 0, %s34
      %s38 = sphi 0, %s37
      %s54 = sphi 0, %s38
      %s60 = sphi 0, %s62
      %s63 = sphi 0, %s60
      %s64 = sphi 0, %s63
      %s80 = sphi 0, %s64
      %s84 = sphi 0, %s84
      %s86 = sphi 0, %s84
      %s87 = sphi 0, %s86
      %s101 = sphi 0, %s87
      %s105 = sphi 0, %s105
      %s107 = sphi 0, %s105
      %s108 = sphi 0, %s107
      %s122 = sphi 0, %s108
      %s126 = sphi 0, %s126
      %s128 = sphi 0, %s126
      %s129 = sphi 0, %s128
      %s143 = sphi 0, %s129
      %s147 = sphi 0, %s147
      %s149 = sphi 0, %s147
      %s150 = sphi 0, %s149
      %s164 = sphi 0, %s150
      %s168 = sphi 0, %s168
      %s170 = sphi 0, %s168
      %s171 = sphi 0, %s170
      %s185 = sphi 0, %s171
      %s189 = sphi 0, %s189
      %s191 = sphi 0, %s189
      %s192 = sphi 0, %s191
      %s206 = sphi 0, %s192
      %s210 = sphi 0, %s210
      %s212 = sphi 0, %s210
      %s213 = sphi 0, %s212
      %s227 = sphi 0, %s213
      %s231 = sphi 0, %s231
      %s233 = sphi 0, %s231
      %s234 = sphi 0, %s233
      %s248 = sphi 0, %s234
      %s254 = sphi 0, %s256
      %s257 = sphi 0, %s254
      %s258 = sphi 0, %s257
      %s274 = sphi 0, %s258
      %s280 = sphi 0, %s282
      %s283 = sphi 0, %s280
      %s284 = sphi 0, %s283
      %s300 = sphi 0, %s284
    $region4: #{tpu_custom_call.1} parent=1 // loop_header_branch
      %27 = sbr.rel (%p25) target = $region8
    $region5: #{tpu_custom_call.1} parent=1 // loop_body
      %s29 = ssub.s32 %s24, 1
      %s30 = ssub.s32 %s24, 2
      %s31 = sadd.s32 %s24, 1
      %s32 = ssub.s32 %s24, %s31
      %p33 = scmp.eq.s32.totalorder %s32, 0
      %s35 = sadd.s32 %s34, 1
      %s36 = scalar_select %p33, %s34, %s35
      %p39 = pneg %p33
      %p40 = scmp.eq.s32.totalorder %s24, 1
      %p41 = por %p39, %p40
      %p42 = scmp.ne.s32.totalorder %s34, %s37
      %p43 = scmp.eq.s32.totalorder %s24, 0
      %p44 = por %p42, %p43
      %p45 = scmp.ne.s32.totalorder %s34, %s37
      %p46 = scmp.eq.s32.totalorder %s29, 1
      %p47 = por %p45, %p46
      %p48 = scmp.ne.s32.totalorder %s37, %s38
      %p49 = scmp.eq.s32.totalorder %s29, 0
      %p50 = por %p48, %p49
      %p51 = scmp.ne.s32.totalorder %s37, %s38
      %p52 = scmp.eq.s32.totalorder %s30, 1
      %p53 = por %p51, %p52
      %p55 = scmp.ne.s32.totalorder %s38, %s54
      %p56 = scmp.eq.s32.totalorder %s30, 0
      %p57 = por %p55, %p56
      %s58 = ssub.s32 %s24, %s31
      %p59 = scmp.eq.s32.totalorder %s58, 0
      %s61 = sadd.s32 %s60, 1
      %s62 = scalar_select %p59, %s60, %s61
      %p65 = pneg %p59
      %p66 = scmp.eq.s32.totalorder %s24, 1
      %p67 = por %p65, %p66
      %p68 = scmp.ne.s32.totalorder %s60, %s63
      %p69 = scmp.eq.s32.totalorder %s24, 0
      %p70 = por %p68, %p69
      %p71 = scmp.ne.s32.totalorder %s60, %s63
      %p72 = scmp.eq.s32.totalorder %s29, 1
      %p73 = por %p71, %p72
      %p74 = scmp.ne.s32.totalorder %s63, %s64
      %p75 = scmp.eq.s32.totalorder %s29, 0
      %p76 = por %p74, %p75
      %p77 = scmp.ne.s32.totalorder %s63, %s64
      %p78 = scmp.eq.s32.totalorder %s30, 1
      %p79 = por %p77, %p78
      %p81 = scmp.ne.s32.totalorder %s64, %s80
      %p82 = scmp.eq.s32.totalorder %s30, 0
      %p83 = por %p81, %p82
      %s85 = sadd.s32 %s84, 1
      %p88 = scmp.eq.s32.totalorder %s24, 1
      %p89 = scmp.ne.s32.totalorder %s84, %s86
      %p90 = scmp.eq.s32.totalorder %s24, 0
      %p91 = por %p89, %p90
      %p92 = scmp.ne.s32.totalorder %s84, %s86
      %p93 = scmp.eq.s32.totalorder %s29, 1
      %p94 = por %p92, %p93
      %p95 = scmp.ne.s32.totalorder %s86, %s87
      %p96 = scmp.eq.s32.totalorder %s29, 0
      %p97 = por %p95, %p96
      %p98 = scmp.ne.s32.totalorder %s86, %s87
      %p99 = scmp.eq.s32.totalorder %s30, 1
      %p100 = por %p98, %p99
      %p102 = scmp.ne.s32.totalorder %s87, %s101
      %p103 = scmp.eq.s32.totalorder %s30, 0
      %p104 = por %p102, %p103
      %s106 = sadd.s32 %s105, 1
      %p109 = scmp.eq.s32.totalorder %s24, 1
      %p110 = scmp.ne.s32.totalorder %s105, %s107
      %p111 = scmp.eq.s32.totalorder %s24, 0
      %p112 = por %p110, %p111
      %p113 = scmp.ne.s32.totalorder %s105, %s107
      %p114 = scmp.eq.s32.totalorder %s29, 1
      %p115 = por %p113, %p114
      %p116 = scmp.ne.s32.totalorder %s107, %s108
      %p117 = scmp.eq.s32.totalorder %s29, 0
      %p118 = por %p116, %p117
      %p119 = scmp.ne.s32.totalorder %s107, %s108
      %p120 = scmp.eq.s32.totalorder %s30, 1
      %p121 = por %p119, %p120
      %p123 = scmp.ne.s32.totalorder %s108, %s122
      %p124 = scmp.eq.s32.totalorder %s30, 0
      %p125 = por %p123, %p124
      %s127 = sadd.s32 %s126, 1
      %p130 = scmp.eq.s32.totalorder %s24, 1
      %p131 = scmp.ne.s32.totalorder %s126, %s128
      %p132 = scmp.eq.s32.totalorder %s24, 0
      %p133 = por %p131, %p132
      %p134 = scmp.ne.s32.totalorder %s126, %s128
      %p135 = scmp.eq.s32.totalorder %s29, 1
      %p136 = por %p134, %p135
      %p137 = scmp.ne.s32.totalorder %s128, %s129
      %p138 = scmp.eq.s32.totalorder %s29, 0
      %p139 = por %p137, %p138
      %p140 = scmp.ne.s32.totalorder %s128, %s129
      %p141 = scmp.eq.s32.totalorder %s30, 1
      %p142 = por %p140, %p141
      %p144 = scmp.ne.s32.totalorder %s129, %s143
      %p145 = scmp.eq.s32.totalorder %s30, 0
      %p146 = por %p144, %p145
      %s148 = sadd.s32 %s147, 1
      %p151 = scmp.eq.s32.totalorder %s24, 1
      %p152 = scmp.ne.s32.totalorder %s147, %s149
      %p153 = scmp.eq.s32.totalorder %s24, 0
      %p154 = por %p152, %p153
      %p155 = scmp.ne.s32.totalorder %s147, %s149
      %p156 = scmp.eq.s32.totalorder %s29, 1
      %p157 = por %p155, %p156
      %p158 = scmp.ne.s32.totalorder %s149, %s150
      %p159 = scmp.eq.s32.totalorder %s29, 0
      %p160 = por %p158, %p159
      %p161 = scmp.ne.s32.totalorder %s149, %s150
      %p162 = scmp.eq.s32.totalorder %s30, 1
      %p163 = por %p161, %p162
      %p165 = scmp.ne.s32.totalorder %s150, %s164
      %p166 = scmp.eq.s32.totalorder %s30, 0
      %p167 = por %p165, %p166
      %s169 = sadd.s32 %s168, 1
      %p172 = scmp.eq.s32.totalorder %s24, 1
      %p173 = scmp.ne.s32.totalorder %s168, %s170
      %p174 = scmp.eq.s32.totalorder %s24, 0
      %p175 = por %p173, %p174
      %p176 = scmp.ne.s32.totalorder %s168, %s170
      %p177 = scmp.eq.s32.totalorder %s29, 1
      %p178 = por %p176, %p177
      %p179 = scmp.ne.s32.totalorder %s170, %s171
      %p180 = scmp.eq.s32.totalorder %s29, 0
      %p181 = por %p179, %p180
      %p182 = scmp.ne.s32.totalorder %s170, %s171
      %p183 = scmp.eq.s32.totalorder %s30, 1
      %p184 = por %p182, %p183
      %p186 = scmp.ne.s32.totalorder %s171, %s185
      %p187 = scmp.eq.s32.totalorder %s30, 0
      %p188 = por %p186, %p187
      %s190 = sadd.s32 %s189, 1
      %p193 = scmp.eq.s32.totalorder %s24, 1
      %p194 = scmp.ne.s32.totalorder %s189, %s191
      %p195 = scmp.eq.s32.totalorder %s24, 0
      %p196 = por %p194, %p195
      %p197 = scmp.ne.s32.totalorder %s189, %s191
      %p198 = scmp.eq.s32.totalorder %s29, 1
      %p199 = por %p197, %p198
      %p200 = scmp.ne.s32.totalorder %s191, %s192
      %p201 = scmp.eq.s32.totalorder %s29, 0
      %p202 = por %p200, %p201
      %p203 = scmp.ne.s32.totalorder %s191, %s192
      %p204 = scmp.eq.s32.totalorder %s30, 1
      %p205 = por %p203, %p204
      %p207 = scmp.ne.s32.totalorder %s192, %s206
      %p208 = scmp.eq.s32.totalorder %s30, 0
      %p209 = por %p207, %p208
      %s211 = sadd.s32 %s210, 1
      %p214 = scmp.eq.s32.totalorder %s24, 1
      %p215 = scmp.ne.s32.totalorder %s210, %s212
      %p216 = scmp.eq.s32.totalorder %s24, 0
      %p217 = por %p215, %p216
      %p218 = scmp.ne.s32.totalorder %s210, %s212
      %p219 = scmp.eq.s32.totalorder %s29, 1
      %p220 = por %p218, %p219
      %p221 = scmp.ne.s32.totalorder %s212, %s213
      %p222 = scmp.eq.s32.totalorder %s29, 0
      %p223 = por %p221, %p222
      %p224 = scmp.ne.s32.totalorder %s212, %s213
      %p225 = scmp.eq.s32.totalorder %s30, 1
      %p226 = por %p224, %p225
      %p228 = scmp.ne.s32.totalorder %s213, %s227
      %p229 = scmp.eq.s32.totalorder %s30, 0
      %p230 = por %p228, %p229
      %s232 = sadd.s32 %s231, 1
      %p235 = scmp.eq.s32.totalorder %s24, 1
      %p236 = scmp.ne.s32.totalorder %s231, %s233
      %p237 = scmp.eq.s32.totalorder %s24, 0
      %p238 = por %p236, %p237
      %p239 = scmp.ne.s32.totalorder %s231, %s233
      %p240 = scmp.eq.s32.totalorder %s29, 1
      %p241 = por %p239, %p240
      %p242 = scmp.ne.s32.totalorder %s233, %s234
      %p243 = scmp.eq.s32.totalorder %s29, 0
      %p244 = por %p242, %p243
      %p245 = scmp.ne.s32.totalorder %s233, %s234
      %p246 = scmp.eq.s32.totalorder %s30, 1
      %p247 = por %p245, %p246
      %p249 = scmp.ne.s32.totalorder %s234, %s248
      %p250 = scmp.eq.s32.totalorder %s30, 0
      %p251 = por %p249, %p250
      %s252 = ssub.s32 %s24, %s31
      %p253 = scmp.eq.s32.totalorder %s252, 0
      %s255 = sadd.s32 %s254, 1
      %s256 = scalar_select %p253, %s254, %s255
      %p259 = pneg %p253
      %p260 = scmp.eq.s32.totalorder %s24, 1
      %p261 = por %p259, %p260
      %p262 = scmp.ne.s32.totalorder %s254, %s257
      %p263 = scmp.eq.s32.totalorder %s24, 0
      %p264 = por %p262, %p263
      %p265 = scmp.ne.s32.totalorder %s254, %s257
      %p266 = scmp.eq.s32.totalorder %s29, 1
      %p267 = por %p265, %p266
      %p268 = scmp.ne.s32.totalorder %s257, %s258
      %p269 = scmp.eq.s32.totalorder %s29, 0
      %p270 = por %p268, %p269
      %p271 = scmp.ne.s32.totalorder %s257, %s258
      %p272 = scmp.eq.s32.totalorder %s30, 1
      %p273 = por %p271, %p272
      %p275 = scmp.ne.s32.totalorder %s258, %s274
      %p276 = scmp.eq.s32.totalorder %s30, 0
      %p277 = por %p275, %p276
      %s278 = ssub.s32 %s24, %s31
      %p279 = scmp.eq.s32.totalorder %s278, 0
      %s281 = sadd.s32 %s280, 1
      %s282 = scalar_select %p279, %s280, %s281
      %p285 = pneg %p279
      %p286 = scmp.eq.s32.totalorder %s24, 1
      %p287 = por %p285, %p286
      %p288 = scmp.ne.s32.totalorder %s280, %s283
      %p289 = scmp.eq.s32.totalorder %s24, 0
      %p290 = por %p288, %p289
      %p291 = scmp.ne.s32.totalorder %s280, %s283
      %p292 = scmp.eq.s32.totalorder %s29, 1
      %p293 = por %p291, %p292
      %p294 = scmp.ne.s32.totalorder %s283, %s284
      %p295 = scmp.eq.s32.totalorder %s29, 0
      %p296 = por %p294, %p295
      %p297 = scmp.ne.s32.totalorder %s283, %s284
      %p298 = scmp.eq.s32.totalorder %s30, 1
      %p299 = por %p297, %p298
      %p301 = scmp.ne.s32.totalorder %s284, %s300
      %p302 = scmp.eq.s32.totalorder %s30, 0
      %p303 = por %p301, %p302
      %p304 = scmp.le.s32.totalorder 1, %s24
      %p305 = scmp.lt.s32.totalorder %s24, 3
      %p306 = pnand %p304, %p305
      %p307 = pneg %p306
      // Predicated region
      $region9: #{tpu_custom_call.1} parent=5 // pred_check
        _
      $region10: #{tpu_custom_call.1} parent=5 // pred_check_branch
        %309 = sbr.rel (%p306) target = $region12
      $region11: #{tpu_custom_call.1} parent=5 // pred_region
        %s310 = ssub.s32 %s24, 1
        // Predicated region
        $region13: #{tpu_custom_call.1} parent=11 // pred_check
          %p311 = pneg %p97
        $region14: #{tpu_custom_call.1} parent=11 // pred_check_branch
          %313 = sbr.rel (%p311) target = $region16
        $region15: #{tpu_custom_call.1} parent=11 // pred_region
          _
        $region16: #{tpu_custom_call.1} parent=11 // pred_fallthru
          _
        // Predicated region
        $region17: #{tpu_custom_call.1} parent=11 // pred_check
          %p314 = pneg %p118
        $region18: #{tpu_custom_call.1} parent=11 // pred_check_branch
          %316 = sbr.rel (%p314) target = $region20
        $region19: #{tpu_custom_call.1} parent=11 // pred_region
          _
        $region20: #{tpu_custom_call.1} parent=11 // pred_fallthru
          _
        // Predicated region
        $region21: #{tpu_custom_call.1} parent=11 // pred_check
          %p317 = pneg %p139
        $region22: #{tpu_custom_call.1} parent=11 // pred_check_branch
          %319 = sbr.rel (%p317) target = $region24
        $region23: #{tpu_custom_call.1} parent=11 // pred_region
          _
        $region24: #{tpu_custom_call.1} parent=11 // pred_fallthru
          _
        // Predicated region
        $region25: #{tpu_custom_call.1} parent=11 // pred_check
          %p320 = pneg %p160
        $region26: #{tpu_custom_call.1} parent=11 // pred_check_branch
          %322 = sbr.rel (%p320) target = $region28
        $region27: #{tpu_custom_call.1} parent=11 // pred_region
          _
        $region28: #{tpu_custom_call.1} parent=11 // pred_fallthru
          _
        // Predicated region
        $region29: #{tpu_custom_call.1} parent=11 // pred_check
          %p323 = pneg %p181
        $region30: #{tpu_custom_call.1} parent=11 // pred_check_branch
          %325 = sbr.rel (%p323) target = $region32
        $region31: #{tpu_custom_call.1} parent=11 // pred_region
          _
        $region32: #{tpu_custom_call.1} parent=11 // pred_fallthru
          _
        // Predicated region
        $region33: #{tpu_custom_call.1} parent=11 // pred_check
          %p326 = pneg %p202
        $region34: #{tpu_custom_call.1} parent=11 // pred_check_branch
          %328 = sbr.rel (%p326) target = $region36
        $region35: #{tpu_custom_call.1} parent=11 // pred_region
          _
        $region36: #{tpu_custom_call.1} parent=11 // pred_fallthru
          _
        // Predicated region
        $region37: #{tpu_custom_call.1} parent=11 // pred_check
          %p329 = pneg %p223
        $region38: #{tpu_custom_call.1} parent=11 // pred_check_branch
          %331 = sbr.rel (%p329) target = $region40
        $region39: #{tpu_custom_call.1} parent=11 // pred_region
          _
        $region40: #{tpu_custom_call.1} parent=11 // pred_fallthru
          _
        // Predicated region
        $region41: #{tpu_custom_call.1} parent=11 // pred_check
          %p332 = pneg %p244
        $region42: #{tpu_custom_call.1} parent=11 // pred_check_branch
          %334 = sbr.rel (%p332) target = $region44
        $region43: #{tpu_custom_call.1} parent=11 // pred_region
          _
        $region44: #{tpu_custom_call.1} parent=11 // pred_fallthru
          _
      $region12: #{tpu_custom_call.1} parent=5 // pred_fallthru
        _
      %p335 = scmp.lt.s32.totalorder %s24, 2
      // Predicated region
      $region45: #{tpu_custom_call.1} parent=5 // pred_check
        %p336 = pneg %p335
      $region46: #{tpu_custom_call.1} parent=5 // pred_check_branch
        %338 = sbr.rel (%p336) target = $region48
      $region47: #{tpu_custom_call.1} parent=5 // pred_region
        // Predicated region
        $region49: #{tpu_custom_call.1} parent=47 // pred_check
          %p339 = pneg %p44
        $region50: #{tpu_custom_call.1} parent=47 // pred_check_branch
          %341 = sbr.rel (%p339) target = $region52
        $region51: #{tpu_custom_call.1} parent=47 // pred_region
          %s342 = smul.u32 16, %s24
          %p343 = scmp.lt.s32.totalorder %s342, 31
          %s344 = scalar_select %p343, %s342, 31
          %s345 = smul.addr %s344, 4
          %s346 = scalar_lea.vmem %s0, %s345
          %s347 = smul.u32 16, %s24
        $region52: #{tpu_custom_call.1} parent=47 // pred_fallthru
          _
        // Predicated region
        $region53: #{tpu_custom_call.1} parent=47 // pred_check
          %p348 = pneg %p70
        $region54: #{tpu_custom_call.1} parent=47 // pred_check_branch
          %350 = sbr.rel (%p348) target = $region56
        $region55: #{tpu_custom_call.1} parent=47 // pred_region
          %s351 = smul.u32 16, %s24
          %p352 = scmp.lt.s32.totalorder %s351, 31
          %s353 = scalar_select %p352, %s351, 31
          %s354 = smul.addr %s353, 8
          %s355 = scalar_lea.vmem %s1, %s354
          %s356 = smul.u32 16, %s24
        $region56: #{tpu_custom_call.1} parent=47 // pred_fallthru
          _
      $region48: #{tpu_custom_call.1} parent=5 // pred_fallthru
        _
      %p357 = scmp.le.s32.totalorder 1, %s24
      %p358 = scmp.lt.s32.totalorder %s24, 3
      %p359 = pnand %p357, %p358
      %p360 = pneg %p359
      // Predicated region
      $region57: #{tpu_custom_call.1} parent=5 // pred_check
        _
      $region58: #{tpu_custom_call.1} parent=5 // pred_check_branch
        %362 = sbr.rel (%p359) target = $region60
      $region59: #{tpu_custom_call.1} parent=5 // pred_region
        %s363 = ssub.s32 %s24, 1
        %s364 = smul.u32 16, %s29
        %p365 = scmp.lt.s32.totalorder %s364, 31
        %s366 = scalar_select %p365, %s364, 31
        %s367 = smul.addr %s366, 4
        %s368 = scalar_lea.vmem %s0, %s367
        %p369 = pneg %p50
        %p370 = pneg %p47
        %s371 = smul.u32 16, %s29
        %p372 = scmp.lt.s32.totalorder %s371, 31
        %s373 = scalar_select %p372, %s371, 31
        %s374 = smul.addr %s373, 8
        %s375 = scalar_lea.vmem %s1, %s374
        %p376 = pneg %p76
        %p377 = pneg %p73
        %p378 = pneg %p97
        %p379 = pneg %p94
        %p380 = pneg %p118
        %p381 = pneg %p115
        %p382 = pneg %p139
        %p383 = pneg %p136
        %p384 = pneg %p160
        %p385 = pneg %p157
        %p386 = pneg %p181
        %p387 = pneg %p178
        %p388 = pneg %p202
        %p389 = pneg %p199
        %p390 = pneg %p223
        %p391 = pneg %p220
        %p392 = pneg %p244
        %p393 = pneg %p241
        %p394 = pneg %p270
        %p395 = pneg %p267
        %s396 = sand.u32 %s257, 1
        %s397 = scalar_lea.sflag [#allocation3], %s396
        %s398 = sand.u32 %s257, 1
        %s399 = smul.addr %s398, 128
        %s400 = scalar_lea.vmem [#allocation2], %s399
        %p401 = pneg %p296
        %p402 = pneg %p293
        %s403 = sand.u32 %s283, 1
        %s404 = scalar_lea.sflag [#allocation5], %s403
        %s405 = sand.u32 %s283, 1
        %s406 = smul.addr %s405, 128
        %s407 = scalar_lea.vmem [#allocation4], %s406
        %s408 = smul.u32 16, %s29
        %p409 = scmp.lt.s32.totalorder %s408, 31
        %s410 = scalar_select %p409, %s408, 31
        %s411 = smul.addr %s410, 4
        %s412 = scalar_lea.vmem %s0, %s411
        %s413 = smul.u32 16, %s29
        %s414 = smul.u32 16, %s29
        %p415 = scmp.lt.s32.totalorder %s414, 31
        %s416 = scalar_select %p415, %s414, 31
        %s417 = smul.addr %s416, 8
        %s418 = scalar_lea.vmem %s1, %s417
        %s419 = smul.u32 16, %s29
        %s420 = smul.u32 16, %s29
        %s421 = smul.u32 16, %s29
        %v423 = vld [vmem:[%s412] sm:$0xf]
        %v424 = vld [vmem:[%s412 + $0x4] sm:$0xf]
        %v425 = vld [vmem:[%s412 + $0x8] sm:$0xf]
        %v426 = vld [vmem:[%s412 + $0xc] sm:$0xf]
        %v427 = vld [vmem:[%s412 + $0x10] sm:$0xf]
        %v428 = vld [vmem:[%s412 + $0x14] sm:$0xf]
        %v429 = vld [vmem:[%s412 + $0x18] sm:$0xf]
        %v430 = vld [vmem:[%s412 + $0x1c] sm:$0xf]
        %v431 = vld [vmem:[%s412 + $0x20] sm:$0xf]
        %v432 = vld [vmem:[%s412 + $0x24] sm:$0xf]
        %v433 = vld [vmem:[%s412 + $0x28] sm:$0xf]
        %v434 = vld [vmem:[%s412 + $0x2c] sm:$0xf]
        %v435 = vld [vmem:[%s412 + $0x30] sm:$0xf]
        %v436 = vld [vmem:[%s412 + $0x34] sm:$0xf]
        %v437 = vld [vmem:[%s412 + $0x38] sm:$0xf]
        %v438 = vld [vmem:[%s412 + $0x3c] sm:$0xf]
        %v439 = vld [vmem:[%s2] sm:$0xf]
        %v440 = vld [vmem:[%s2 + $0x4] sm:$0xf]
        %v441 = vld [vmem:[%s2 + $0x8] sm:$0xf]
        %v442 = vld [vmem:[%s2 + $0xc] sm:$0xf]
        %v443 = vld [vmem:[%s2 + $0x10] sm:$0xf]
        %v444 = vld [vmem:[%s2 + $0x14] sm:$0xf]
        %v445 = vld [vmem:[%s2 + $0x18] sm:$0xf]
        %v446 = vld [vmem:[%s2 + $0x1c] sm:$0xf]
        %v447 = vld [vmem:[%s2 + $0x20] sm:$0xf]
        %v448 = vld [vmem:[%s2 + $0x24] sm:$0xf]
        %v449 = vld [vmem:[%s2 + $0x28] sm:$0xf]
        %v450 = vld [vmem:[%s2 + $0x2c] sm:$0xf]
        %v451 = vld [vmem:[%s2 + $0x30] sm:$0xf]
        %v452 = vld [vmem:[%s2 + $0x34] sm:$0xf]
        %v453 = vld [vmem:[%s2 + $0x38] sm:$0xf]
        %v454 = vld [vmem:[%s2 + $0x3c] sm:$0xf]
        %v455 = vld [vmem:[%s3] sm:$0x1]
        %v457 = vlaneseq
        %v458 = vshrl.u32 %v457, 7
        %v459 = vsub.s32 0, %v458
        %v460 = vrot.slane %v455, %v459
        %v478 = vunpack.c.l.b16 %v423
        %v479 = vunpack.c.l.b16 %v424
        %v480 = vunpack.c.l.b16 %v425
        %v481 = vunpack.c.l.b16 %v426
        %v482 = vunpack.c.l.b16 %v427
        %v483 = vunpack.c.l.b16 %v428
        %v484 = vunpack.c.l.b16 %v429
        %v485 = vunpack.c.l.b16 %v430
        %v486 = vunpack.c.l.b16 %v431
        %v487 = vunpack.c.l.b16 %v432
        %v488 = vunpack.c.l.b16 %v433
        %v489 = vunpack.c.l.b16 %v434
        %v490 = vunpack.c.l.b16 %v435
        %v491 = vunpack.c.l.b16 %v436
        %v492 = vunpack.c.l.b16 %v437
        %v493 = vunpack.c.l.b16 %v438
        %v494 = vpack.c.b16 %v479, %v478
        %v495 = vpack.c.b16 %v481, %v480
        %v496 = vpack.c.b16 %v483, %v482
        %v497 = vpack.c.b16 %v485, %v484
        %v498 = vpack.c.b16 %v487, %v486
        %v499 = vpack.c.b16 %v489, %v488
        %v500 = vpack.c.b16 %v491, %v490
        %v501 = vpack.c.b16 %v493, %v492
        %v526 = vunpack.c.l.b16 %v439
        %v527 = vunpack.c.l.b16 %v440
        %v528 = vunpack.c.l.b16 %v441
        %v529 = vunpack.c.l.b16 %v442
        %v530 = vunpack.c.l.b16 %v443
        %v531 = vunpack.c.l.b16 %v444
        %v532 = vunpack.c.l.b16 %v445
        %v533 = vunpack.c.l.b16 %v446
        %v534 = vunpack.c.l.b16 %v447
        %v535 = vunpack.c.l.b16 %v448
        %v536 = vunpack.c.l.b16 %v449
        %v537 = vunpack.c.l.b16 %v450
        %v538 = vunpack.c.l.b16 %v451
        %v539 = vunpack.c.l.b16 %v452
        %v540 = vunpack.c.l.b16 %v453
        %v541 = vunpack.c.l.b16 %v454
        %v542 = vpack.c.b16 %v527, %v526
        %v543 = vpack.c.b16 %v529, %v528
        %v544 = vpack.c.b16 %v531, %v530
        %v545 = vpack.c.b16 %v533, %v532
        %v546 = vpack.c.b16 %v535, %v534
        %v547 = vpack.c.b16 %v537, %v536
        %v548 = vpack.c.b16 %v539, %v538
        %v549 = vpack.c.b16 %v541, %v540
        %558 = vmatprep.subr.bf16.mxu0 0
        %559 = vmatpush1.bf16.msra.mxu0 %v542
        %560 = vmatprep.subr.bf16.mxu0 0
        %561 = vmatpush1.bf16.msra.mxu0 %v543
        %562 = vmatprep.subr.bf16.mxu0 0
        %563 = vmatpush1.bf16.msra.mxu0 %v544
        %564 = vmatprep.subr.bf16.mxu0 0
        %565 = vmatpush1.bf16.msra.mxu0 %v545
        %566 = vmatprep.subr.bf16.mxu0 0
        %567 = vmatpush1.bf16.msra.mxu0 %v546
        %568 = vmatprep.subr.bf16.mxu0 0
        %569 = vmatpush1.bf16.msra.mxu0 %v547
        %570 = vmatprep.subr.bf16.mxu0 0
        %571 = vmatpush1.bf16.msra.mxu0 %v548
        %572 = vmatprep.subr.bf16.mxu0 0
        %573 = vmatpush1.bf16.msra.mxu0 %v549
        %574 = vmatprep.subr.bf16.mxu0 0
        %575 = vmatpush1.bf16.msra.mxu0 0
        %576 = vmatprep.subr.bf16.mxu0 0
        %577 = vmatpush1.bf16.msra.mxu0 0
        %578 = vmatprep.subr.bf16.mxu0 0
        %579 = vmatpush1.bf16.msra.mxu0 0
        %580 = vmatprep.subr.bf16.mxu0 0
        %581 = vmatpush1.bf16.msra.mxu0 0
        %582 = vmatprep.subr.bf16.mxu0 0
        %583 = vmatpush1.bf16.msra.mxu0 0
        %584 = vmatprep.subr.bf16.mxu0 0
        %585 = vmatpush1.bf16.msra.mxu0 0
        %586 = vmatprep.subr.bf16.mxu0 0
        %587 = vmatpush1.bf16.msra.mxu0 0
        %588 = vmatprep.subr.bf16.mxu0 0
        %589 = vmatpush1.bf16.msra.mxu0 0
        %590 = vmatprep.mubr.bf16.mxu0 0
        %591 = vmatmul.mubr.bf16.gmra.mrb[0].mxu0 %v494
        %v592 = vpop.f32.mrb[0].mxu0
        %v593 = vadd.f32 %v460, %v592
        %v594 = vpop.f32.mrb[0].mxu0
        %v595 = vpop.f32.mrb[0].mxu0
        %v596 = vadd.f32 %v460, %v595
        %v597 = vpop.f32.mrb[0].mxu0
        %598 = vmatprep.mubr.bf16.mxu0 0
        %599 = vmatmul.mubr.bf16.gmra.mrb[0].mxu0 %v495
        %v600 = vpop.f32.mrb[0].mxu0
        %v601 = vadd.f32 %v460, %v600
        %v602 = vpop.f32.mrb[0].mxu0
        %v603 = vpop.f32.mrb[0].mxu0
        %v604 = vadd.f32 %v460, %v603
        %v605 = vpop.f32.mrb[0].mxu0
        %606 = vmatprep.mubr.bf16.mxu0 0
        %607 = vmatmul.mubr.bf16.gmra.mrb[0].mxu0 %v496
        %v608 = vpop.f32.mrb[0].mxu0
        %v609 = vadd.f32 %v460, %v608
        %v610 = vpop.f32.mrb[0].mxu0
        %v611 = vpop.f32.mrb[0].mxu0
        %v612 = vadd.f32 %v460, %v611
        %v613 = vpop.f32.mrb[0].mxu0
        %614 = vmatprep.mubr.bf16.mxu0 0
        %615 = vmatmul.mubr.bf16.gmra.mrb[0].mxu0 %v497
        %v616 = vpop.f32.mrb[0].mxu0
        %v617 = vadd.f32 %v460, %v616
        %v618 = vpop.f32.mrb[0].mxu0
        %v619 = vpop.f32.mrb[0].mxu0
        %v620 = vadd.f32 %v460, %v619
        %v621 = vpop.f32.mrb[0].mxu0
        %622 = vmatprep.mubr.bf16.mxu0 0
        %623 = vmatmul.mubr.bf16.gmra.mrb[0].mxu0 %v498
        %v624 = vpop.f32.mrb[0].mxu0
        %v625 = vadd.f32 %v460, %v624
        %v626 = vpop.f32.mrb[0].mxu0
        %v627 = vpop.f32.mrb[0].mxu0
        %v628 = vadd.f32 %v460, %v627
        %v629 = vpop.f32.mrb[0].mxu0
        %630 = vmatprep.mubr.bf16.mxu0 0
        %631 = vmatmul.mubr.bf16.gmra.mrb[0].mxu0 %v499
        %v632 = vpop.f32.mrb[0].mxu0
        %v633 = vadd.f32 %v460, %v632
        %v634 = vpop.f32.mrb[0].mxu0
        %v635 = vpop.f32.mrb[0].mxu0
        %v636 = vadd.f32 %v460, %v635
        %v637 = vpop.f32.mrb[0].mxu0
        %638 = vmatprep.mubr.bf16.mxu0 0
        %639 = vmatmul.mubr.bf16.gmra.mrb[0].mxu0 %v500
        %v640 = vpop.f32.mrb[0].mxu0
        %v641 = vadd.f32 %v460, %v640
        %v642 = vpop.f32.mrb[0].mxu0
        %v643 = vpop.f32.mrb[0].mxu0
        %v644 = vadd.f32 %v460, %v643
        %v645 = vpop.f32.mrb[0].mxu0
        %646 = vmatprep.mubr.bf16.mxu0 0
        %647 = vmatmul.mubr.bf16.gmra.mrb[0].mxu0 %v501
        %v648 = vpop.f32.mrb[0].mxu0
        %v649 = vadd.f32 %v460, %v648
        %v650 = vpop.f32.mrb[0].mxu0
        %v651 = vpop.f32.mrb[0].mxu0
        %v652 = vadd.f32 %v460, %v651
        %v653 = vpop.f32.mrb[0].mxu0
        %654 = vdwg.mxu0
        %v655 = vmax.f32 %v593, 0.0
        %v656 = vmax.f32 %v596, 0.0
        %v657 = vmax.f32 %v601, 0.0
        %v658 = vmax.f32 %v604, 0.0
        %v659 = vmax.f32 %v609, 0.0
        %v660 = vmax.f32 %v612, 0.0
        %v661 = vmax.f32 %v617, 0.0
        %v662 = vmax.f32 %v620, 0.0
        %v663 = vmax.f32 %v625, 0.0
        %v664 = vmax.f32 %v628, 0.0
        %v665 = vmax.f32 %v633, 0.0
        %v666 = vmax.f32 %v636, 0.0
        %v667 = vmax.f32 %v641, 0.0
        %v668 = vmax.f32 %v644, 0.0
        %v669 = vmax.f32 %v649, 0.0
        %v670 = vmax.f32 %v652, 0.0
        %v671 = vpack.c.bf16 %v656, %v655
        %v672 = vpack.c.bf16 %v658, %v657
        %v673 = vpack.c.bf16 %v660, %v659
        %v674 = vpack.c.bf16 %v662, %v661
        %v675 = vpack.c.bf16 %v664, %v663
        %v676 = vpack.c.bf16 %v666, %v665
        %v677 = vpack.c.bf16 %v668, %v667
        %v678 = vpack.c.bf16 %v670, %v669
        %v679 = vld [vmem:[%s4] sm:$0xf]
        %v680 = vld [vmem:[%s4 + $0x4] sm:$0xf]
        %v681 = vld [vmem:[%s4 + $0x8] sm:$0xf]
        %v682 = vld [vmem:[%s4 + $0xc] sm:$0xf]
        %v683 = vld [vmem:[%s4 + $0x10] sm:$0xf]
        %v684 = vld [vmem:[%s4 + $0x14] sm:$0xf]
        %v685 = vld [vmem:[%s4 + $0x18] sm:$0xf]
        %v686 = vld [vmem:[%s4 + $0x1c] sm:$0xf]
        %v687 = vld [vmem:[%s5] sm:$0x1]
        %v689 = vlaneseq
        %v690 = vshrl.u32 %v689, 7
        %v691 = vsub.s32 0, %v690
        %v692 = vrot.slane %v687, %v691
        %v702 = vunpack.c.l.b16 %v679
        %v703 = vunpack.c.l.b16 %v680
        %v704 = vunpack.c.l.b16 %v681
        %v705 = vunpack.c.l.b16 %v682
        %v706 = vunpack.c.l.b16 %v683
        %v707 = vunpack.c.l.b16 %v684
        %v708 = vunpack.c.l.b16 %v685
        %v709 = vunpack.c.l.b16 %v686
        %v710 = vpack.c.b16 %v703, %v702
        %v711 = vpack.c.b16 %v705, %v704
        %v712 = vpack.c.b16 %v707, %v706
        %v713 = vpack.c.b16 %v709, %v708
        %vm718 = vcmask 523264
        %v720 = vsel %vm718, %v671, 0
        %v723 = vsel %vm718, %v672, 0
        %v726 = vsel %vm718, %v673, 0
        %v729 = vsel %vm718, %v674, 0
        %v732 = vsel %vm718, %v675, 0
        %v735 = vsel %vm718, %v676, 0
        %v738 = vsel %vm718, %v677, 0
        %v741 = vsel %vm718, %v678, 0
        %743 = vmatprep.subr.bf16.mxu0 0
        %744 = vmatpush1.bf16.msra.mxu0 %v710
        %745 = vmatprep.subr.bf16.mxu0 0
        %746 = vmatpush1.bf16.msra.mxu0 %v711
        %747 = vmatprep.subr.bf16.mxu0 0
        %748 = vmatpush1.bf16.msra.mxu0 %v712
        %749 = vmatprep.subr.bf16.mxu0 0
        %750 = vmatpush1.bf16.msra.mxu0 %v713
        %751 = vmatprep.subr.bf16.mxu0 0
        %752 = vmatpush1.bf16.msra.mxu0 0
        %753 = vmatprep.subr.bf16.mxu0 0
        %754 = vmatpush1.bf16.msra.mxu0 0
        %755 = vmatprep.subr.bf16.mxu0 0
        %756 = vmatpush1.bf16.msra.mxu0 0
        %757 = vmatprep.subr.bf16.mxu0 0
        %758 = vmatpush1.bf16.msra.mxu0 0
        %759 = vmatprep.subr.bf16.mxu0 0
        %760 = vmatpush1.bf16.msra.mxu0 0
        %761 = vmatprep.subr.bf16.mxu0 0
        %762 = vmatpush1.bf16.msra.mxu0 0
        %763 = vmatprep.subr.bf16.mxu0 0
        %764 = vmatpush1.bf16.msra.mxu0 0
        %765 = vmatprep.subr.bf16.mxu0 0
        %766 = vmatpush1.bf16.msra.mxu0 0
        %767 = vmatprep.subr.bf16.mxu0 0
        %768 = vmatpush1.bf16.msra.mxu0 0
        %769 = vmatprep.subr.bf16.mxu0 0
        %770 = vmatpush1.bf16.msra.mxu0 0
        %771 = vmatprep.subr.bf16.mxu0 0
        %772 = vmatpush1.bf16.msra.mxu0 0
        %773 = vmatprep.subr.bf16.mxu0 0
        %774 = vmatpush1.bf16.msra.mxu0 0
        %775 = vmatprep.mubr.bf16.mxu0 0
        %776 = vmatmul.mubr.bf16.gmra.mrb[0].mxu0 %v720
        %v777 = vpop.f32.mrb[0].mxu0
        %v778 = vadd.f32 %v692, %v777
        %v779 = vpop.f32.mrb[0].mxu0
        %v780 = vpop.f32.mrb[0].mxu0
        %v781 = vadd.f32 %v692, %v780
        %v782 = vpop.f32.mrb[0].mxu0
        %783 = vmatprep.mubr.bf16.mxu0 0
        %784 = vmatmul.mubr.bf16.gmra.mrb[0].mxu0 %v723
        %v785 = vpop.f32.mrb[0].mxu0
        %v786 = vadd.f32 %v692, %v785
        %v787 = vpop.f32.mrb[0].mxu0
        %v788 = vpop.f32.mrb[0].mxu0
        %v789 = vadd.f32 %v692, %v788
        %v790 = vpop.f32.mrb[0].mxu0
        %791 = vmatprep.mubr.bf16.mxu0 0
        %792 = vmatmul.mubr.bf16.gmra.mrb[0].mxu0 %v726
        %v793 = vpop.f32.mrb[0].mxu0
        %v794 = vadd.f32 %v692, %v793
        %v795 = vpop.f32.mrb[0].mxu0
        %v796 = vpop.f32.mrb[0].mxu0
        %v797 = vadd.f32 %v692, %v796
        %v798 = vpop.f32.mrb[0].mxu0
        %799 = vmatprep.mubr.bf16.mxu0 0
        %800 = vmatmul.mubr.bf16.gmra.mrb[0].mxu0 %v729
        %v801 = vpop.f32.mrb[0].mxu0
        %v802 = vadd.f32 %v692, %v801
        %v803 = vpop.f32.mrb[0].mxu0
        %v804 = vpop.f32.mrb[0].mxu0
        %v805 = vadd.f32 %v692, %v804
        %v806 = vpop.f32.mrb[0].mxu0
        %807 = vmatprep.mubr.bf16.mxu0 0
        %808 = vmatmul.mubr.bf16.gmra.mrb[0].mxu0 %v732
        %v809 = vpop.f32.mrb[0].mxu0
        %v810 = vadd.f32 %v692, %v809
        %v811 = vpop.f32.mrb[0].mxu0
        %v812 = vpop.f32.mrb[0].mxu0
        %v813 = vadd.f32 %v692, %v812
        %v814 = vpop.f32.mrb[0].mxu0
        %815 = vmatprep.mubr.bf16.mxu0 0
        %816 = vmatmul.mubr.bf16.gmra.mrb[0].mxu0 %v735
        %v817 = vpop.f32.mrb[0].mxu0
        %v818 = vadd.f32 %v692, %v817
        %v819 = vpop.f32.mrb[0].mxu0
        %v820 = vpop.f32.mrb[0].mxu0
        %v821 = vadd.f32 %v692, %v820
        %v822 = vpop.f32.mrb[0].mxu0
        %823 = vmatprep.mubr.bf16.mxu0 0
        %824 = vmatmul.mubr.bf16.gmra.mrb[0].mxu0 %v738
        %v825 = vpop.f32.mrb[0].mxu0
        %v826 = vadd.f32 %v692, %v825
        %v827 = vpop.f32.mrb[0].mxu0
        %v828 = vpop.f32.mrb[0].mxu0
        %v829 = vadd.f32 %v692, %v828
        %v830 = vpop.f32.mrb[0].mxu0
        %831 = vmatprep.mubr.bf16.mxu0 0
        %832 = vmatmul.mubr.bf16.gmra.mrb[0].mxu0 %v741
        %v833 = vpop.f32.mrb[0].mxu0
        %v834 = vadd.f32 %v692, %v833
        %v835 = vpop.f32.mrb[0].mxu0
        %v836 = vpop.f32.mrb[0].mxu0
        %v837 = vadd.f32 %v692, %v836
        %v838 = vpop.f32.mrb[0].mxu0
        %839 = vdwg.mxu0
        %v840 = vmax.f32 %v778, 0.0
        %v841 = vmax.f32 %v781, 0.0
        %v842 = vmax.f32 %v786, 0.0
        %v843 = vmax.f32 %v789, 0.0
        %v844 = vmax.f32 %v794, 0.0
        %v845 = vmax.f32 %v797, 0.0
        %v846 = vmax.f32 %v802, 0.0
        %v847 = vmax.f32 %v805, 0.0
        %v848 = vmax.f32 %v810, 0.0
        %v849 = vmax.f32 %v813, 0.0
        %v850 = vmax.f32 %v818, 0.0
        %v851 = vmax.f32 %v821, 0.0
        %v852 = vmax.f32 %v826, 0.0
        %v853 = vmax.f32 %v829, 0.0
        %v854 = vmax.f32 %v834, 0.0
        %v855 = vmax.f32 %v837, 0.0
        %v856 = vand.u32 2147483647, %v778
        %v857 = vand.u32 2147483647, %v781
        %v858 = vand.u32 2147483647, %v786
        %v859 = vand.u32 2147483647, %v789
        %v860 = vand.u32 2147483647, %v794
        %v861 = vand.u32 2147483647, %v797
        %v862 = vand.u32 2147483647, %v802
        %v863 = vand.u32 2147483647, %v805
        %v864 = vand.u32 2147483647, %v810
        %v865 = vand.u32 2147483647, %v813
        %v866 = vand.u32 2147483647, %v818
        %v867 = vand.u32 2147483647, %v821
        %v868 = vand.u32 2147483647, %v826
        %v869 = vand.u32 2147483647, %v829
        %v870 = vand.u32 2147483647, %v834
        %v871 = vand.u32 2147483647, %v837
        %v872 = vsub.f32 0.0, %v856
        %v873 = vsub.f32 0.0, %v857
        %v874 = vsub.f32 0.0, %v858
        %v875 = vsub.f32 0.0, %v859
        %v876 = vsub.f32 0.0, %v860
        %v877 = vsub.f32 0.0, %v861
        %v878 = vsub.f32 0.0, %v862
        %v879 = vsub.f32 0.0, %v863
        %v880 = vsub.f32 0.0, %v864
        %v881 = vsub.f32 0.0, %v865
        %v882 = vsub.f32 0.0, %v866
        %v883 = vsub.f32 0.0, %v867
        %v884 = vsub.f32 0.0, %v868
        %v885 = vsub.f32 0.0, %v869
        %v886 = vsub.f32 0.0, %v870
        %v887 = vsub.f32 0.0, %v871
        %v888 = vmul.f32 %v872, 1.442695
        %v889 = vpow.pop %v888
        %v890 = vmul.f32 %v873, 1.442695
        %v891 = vpow.pop %v890
        %v892 = vmul.f32 %v874, 1.442695
        %v893 = vpow.pop %v892
        %v894 = vmul.f32 %v875, 1.442695
        %v895 = vpow.pop %v894
        %v896 = vmul.f32 %v876, 1.442695
        %v897 = vpow.pop %v896
        %v898 = vmul.f32 %v877, 1.442695
        %v899 = vpow.pop %v898
        %v900 = vmul.f32 %v878, 1.442695
        %v901 = vpow.pop %v900
        %v902 = vmul.f32 %v879, 1.442695
        %v903 = vpow.pop %v902
        %v904 = vmul.f32 %v880, 1.442695
        %v905 = vpow.pop %v904
        %v906 = vmul.f32 %v881, 1.442695
        %v907 = vpow.pop %v906
        %v908 = vmul.f32 %v882, 1.442695
        %v909 = vpow.pop %v908
        %v910 = vmul.f32 %v883, 1.442695
        %v911 = vpow.pop %v910
        %v912 = vmul.f32 %v884, 1.442695
        %v913 = vpow.pop %v912
        %v914 = vmul.f32 %v885, 1.442695
        %v915 = vpow.pop %v914
        %v916 = vmul.f32 %v886, 1.442695
        %v917 = vpow.pop %v916
        %v918 = vmul.f32 %v887, 1.442695
        %v919 = vpow.pop %v918
        %v920 = vadd.f32 %v889, 1.0
        %v921 = vlog2.pop %v920
        %v922 = vmul.f32 %v921, 0.6931472
        %v923 = vmul.f32 -0.5, %v889
        %v924 = vadd.f32 %v923, 1.0
        %v925 = vmul.f32 %v924, %v889
        %v926 = vand.u32 2147483647, %v889
        %vm927 = vcmp.lt.f32.partialorder %v926, 0.0004427343
        %v928 = vsel %vm927, %v925, %v922
        %v929 = vadd.f32 %v891, 1.0
        %v930 = vlog2.pop %v929
        %v931 = vmul.f32 %v930, 0.6931472
        %v932 = vmul.f32 -0.5, %v891
        %v933 = vadd.f32 %v932, 1.0
        %v934 = vmul.f32 %v933, %v891
        %v935 = vand.u32 2147483647, %v891
        %vm936 = vcmp.lt.f32.partialorder %v935, 0.0004427343
        %v937 = vsel %vm936, %v934, %v931
        %v938 = vadd.f32 %v893, 1.0
        %v939 = vlog2.pop %v938
        %v940 = vmul.f32 %v939, 0.6931472
        %v941 = vmul.f32 -0.5, %v893
        %v942 = vadd.f32 %v941, 1.0
        %v943 = vmul.f32 %v942, %v893
        %v944 = vand.u32 2147483647, %v893
        %vm945 = vcmp.lt.f32.partialorder %v944, 0.0004427343
        %v946 = vsel %vm945, %v943, %v940
        %v947 = vadd.f32 %v895, 1.0
        %v948 = vlog2.pop %v947
        %v949 = vmul.f32 %v948, 0.6931472
        %v950 = vmul.f32 -0.5, %v895
        %v951 = vadd.f32 %v950, 1.0
        %v952 = vmul.f32 %v951, %v895
        %v953 = vand.u32 2147483647, %v895
        %vm954 = vcmp.lt.f32.partialorder %v953, 0.0004427343
        %v955 = vsel %vm954, %v952, %v949
        %v956 = vadd.f32 %v897, 1.0
        %v957 = vlog2.pop %v956
        %v958 = vmul.f32 %v957, 0.6931472
        %v959 = vmul.f32 -0.5, %v897
        %v960 = vadd.f32 %v959, 1.0
        %v961 = vmul.f32 %v960, %v897
        %v962 = vand.u32 2147483647, %v897
        %vm963 = vcmp.lt.f32.partialorder %v962, 0.0004427343
        %v964 = vsel %vm963, %v961, %v958
        %v965 = vadd.f32 %v899, 1.0
        %v966 = vlog2.pop %v965
        %v967 = vmul.f32 %v966, 0.6931472
        %v968 = vmul.f32 -0.5, %v899
        %v969 = vadd.f32 %v968, 1.0
        %v970 = vmul.f32 %v969, %v899
        %v971 = vand.u32 2147483647, %v899
        %vm972 = vcmp.lt.f32.partialorder %v971, 0.0004427343
        %v973 = vsel %vm972, %v970, %v967
        %v974 = vadd.f32 %v901, 1.0
        %v975 = vlog2.pop %v974
        %v976 = vmul.f32 %v975, 0.6931472
        %v977 = vmul.f32 -0.5, %v901
        %v978 = vadd.f32 %v977, 1.0
        %v979 = vmul.f32 %v978, %v901
        %v980 = vand.u32 2147483647, %v901
        %vm981 = vcmp.lt.f32.partialorder %v980, 0.0004427343
        %v982 = vsel %vm981, %v979, %v976
        %v983 = vadd.f32 %v903, 1.0
        %v984 = vlog2.pop %v983
        %v985 = vmul.f32 %v984, 0.6931472
        %v986 = vmul.f32 -0.5, %v903
        %v987 = vadd.f32 %v986, 1.0
        %v988 = vmul.f32 %v987, %v903
        %v989 = vand.u32 2147483647, %v903
        %vm990 = vcmp.lt.f32.partialorder %v989, 0.0004427343
        %v991 = vsel %vm990, %v988, %v985
        %v992 = vadd.f32 %v905, 1.0
        %v993 = vlog2.pop %v992
        %v994 = vmul.f32 %v993, 0.6931472
        %v995 = vmul.f32 -0.5, %v905
        %v996 = vadd.f32 %v995, 1.0
        %v997 = vmul.f32 %v996, %v905
        %v998 = vand.u32 2147483647, %v905
        %vm999 = vcmp.lt.f32.partialorder %v998, 0.0004427343
        %v1000 = vsel %vm999, %v997, %v994
        %v1001 = vadd.f32 %v907, 1.0
        %v1002 = vlog2.pop %v1001
        %v1003 = vmul.f32 %v1002, 0.6931472
        %v1004 = vmul.f32 -0.5, %v907
        %v1005 = vadd.f32 %v1004, 1.0
        %v1006 = vmul.f32 %v1005, %v907
        %v1007 = vand.u32 2147483647, %v907
        %vm1008 = vcmp.lt.f32.partialorder %v1007, 0.0004427343
        %v1009 = vsel %vm1008, %v1006, %v1003
        %v1010 = vadd.f32 %v909, 1.0
        %v1011 = vlog2.pop %v1010
        %v1012 = vmul.f32 %v1011, 0.6931472
        %v1013 = vmul.f32 -0.5, %v909
        %v1014 = vadd.f32 %v1013, 1.0
        %v1015 = vmul.f32 %v1014, %v909
        %v1016 = vand.u32 2147483647, %v909
        %vm1017 = vcmp.lt.f32.partialorder %v1016, 0.0004427343
        %v1018 = vsel %vm1017, %v1015, %v1012
        %v1019 = vadd.f32 %v911, 1.0
        %v1020 = vlog2.pop %v1019
        %v1021 = vmul.f32 %v1020, 0.6931472
        %v1022 = vmul.f32 -0.5, %v911
        %v1023 = vadd.f32 %v1022, 1.0
        %v1024 = vmul.f32 %v1023, %v911
        %v1025 = vand.u32 2147483647, %v911
        %vm1026 = vcmp.lt.f32.partialorder %v1025, 0.0004427343
        %v1027 = vsel %vm1026, %v1024, %v1021
        %v1028 = vadd.f32 %v913, 1.0
        %v1029 = vlog2.pop %v1028
        %v1030 = vmul.f32 %v1029, 0.6931472
        %v1031 = vmul.f32 -0.5, %v913
        %v1032 = vadd.f32 %v1031, 1.0
        %v1033 = vmul.f32 %v1032, %v913
        %v1034 = vand.u32 2147483647, %v913
        %vm1035 = vcmp.lt.f32.partialorder %v1034, 0.0004427343
        %v1036 = vsel %vm1035, %v1033, %v1030
        %v1037 = vadd.f32 %v915, 1.0
        %v1038 = vlog2.pop %v1037
        %v1039 = vmul.f32 %v1038, 0.6931472
        %v1040 = vmul.f32 -0.5, %v915
        %v1041 = vadd.f32 %v1040, 1.0
        %v1042 = vmul.f32 %v1041, %v915
        %v1043 = vand.u32 2147483647, %v915
        %vm1044 = vcmp.lt.f32.partialorder %v1043, 0.0004427343
        %v1045 = vsel %vm1044, %v1042, %v1039
        %v1046 = vadd.f32 %v917, 1.0
        %v1047 = vlog2.pop %v1046
        %v1048 = vmul.f32 %v1047, 0.6931472
        %v1049 = vmul.f32 -0.5, %v917
        %v1050 = vadd.f32 %v1049, 1.0
        %v1051 = vmul.f32 %v1050, %v917
        %v1052 = vand.u32 2147483647, %v917
        %vm1053 = vcmp.lt.f32.partialorder %v1052, 0.0004427343
        %v1054 = vsel %vm1053, %v1051, %v1048
        %v1055 = vadd.f32 %v919, 1.0
        %v1056 = vlog2.pop %v1055
        %v1057 = vmul.f32 %v1056, 0.6931472
        %v1058 = vmul.f32 -0.5, %v919
        %v1059 = vadd.f32 %v1058, 1.0
        %v1060 = vmul.f32 %v1059, %v919
        %v1061 = vand.u32 2147483647, %v919
        %vm1062 = vcmp.lt.f32.partialorder %v1061, 0.0004427343
        %v1063 = vsel %vm1062, %v1060, %v1057
        %v1064 = vadd.f32 %v840, %v928
        %v1065 = vadd.f32 %v841, %v937
        %v1066 = vadd.f32 %v842, %v946
        %v1067 = vadd.f32 %v843, %v955
        %v1068 = vadd.f32 %v844, %v964
        %v1069 = vadd.f32 %v845, %v973
        %v1070 = vadd.f32 %v846, %v982
        %v1071 = vadd.f32 %v847, %v991
        %v1072 = vadd.f32 %v848, %v1000
        %v1073 = vadd.f32 %v849, %v1009
        %v1074 = vadd.f32 %v850, %v1018
        %v1075 = vadd.f32 %v851, %v1027
        %v1076 = vadd.f32 %v852, %v1036
        %v1077 = vadd.f32 %v853, %v1045
        %v1078 = vadd.f32 %v854, %v1054
        %v1079 = vadd.f32 %v855, %v1063
        %v1080 = vld [vmem:[%s418] sm:$0xff]
        %v1081 = vld [vmem:[%s418 + $0x8] sm:$0xff]
        %v1082 = vld [vmem:[%s418 + $0x10] sm:$0xff]
        %v1083 = vld [vmem:[%s418 + $0x18] sm:$0xff]
        %v1084 = vld [vmem:[%s418 + $0x20] sm:$0xff]
        %v1085 = vld [vmem:[%s418 + $0x28] sm:$0xff]
        %v1086 = vld [vmem:[%s418 + $0x30] sm:$0xff]
        %v1087 = vld [vmem:[%s418 + $0x38] sm:$0xff]
        %v1088 = vld [vmem:[%s418 + $0x40] sm:$0xff]
        %v1089 = vld [vmem:[%s418 + $0x48] sm:$0xff]
        %v1090 = vld [vmem:[%s418 + $0x50] sm:$0xff]
        %v1091 = vld [vmem:[%s418 + $0x58] sm:$0xff]
        %v1092 = vld [vmem:[%s418 + $0x60] sm:$0xff]
        %v1093 = vld [vmem:[%s418 + $0x68] sm:$0xff]
        %v1094 = vld [vmem:[%s418 + $0x70] sm:$0xff]
        %v1095 = vld [vmem:[%s418 + $0x78] sm:$0xff]
        %1112 = vrot.lane.b32.xlu0 %v1080, 32
        %v1113 = vpop.permute.xlu0 %1112
        %1114 = vrot.lane.b32.xlu0 %v1081, 32
        %v1115 = vpop.permute.xlu0 %1114
        %1116 = vrot.lane.b32.xlu0 %v1082, 32
        %v1117 = vpop.permute.xlu0 %1116
        %1118 = vrot.lane.b32.xlu0 %v1083, 32
        %v1119 = vpop.permute.xlu0 %1118
        %1120 = vrot.lane.b32.xlu0 %v1084, 32
        %v1121 = vpop.permute.xlu0 %1120
        %1122 = vrot.lane.b32.xlu0 %v1085, 32
        %v1123 = vpop.permute.xlu0 %1122
        %1124 = vrot.lane.b32.xlu0 %v1086, 32
        %v1125 = vpop.permute.xlu0 %1124
        %1126 = vrot.lane.b32.xlu0 %v1087, 32
        %v1127 = vpop.permute.xlu0 %1126
        %1128 = vrot.lane.b32.xlu0 %v1088, 32
        %v1129 = vpop.permute.xlu0 %1128
        %1130 = vrot.lane.b32.xlu0 %v1089, 32
        %v1131 = vpop.permute.xlu0 %1130
        %1132 = vrot.lane.b32.xlu0 %v1090, 32
        %v1133 = vpop.permute.xlu0 %1132
        %1134 = vrot.lane.b32.xlu0 %v1091, 32
        %v1135 = vpop.permute.xlu0 %1134
        %1136 = vrot.lane.b32.xlu0 %v1092, 32
        %v1137 = vpop.permute.xlu0 %1136
        %1138 = vrot.lane.b32.xlu0 %v1093, 32
        %v1139 = vpop.permute.xlu0 %1138
        %1140 = vrot.lane.b32.xlu0 %v1094, 32
        %v1141 = vpop.permute.xlu0 %1140
        %1142 = vrot.lane.b32.xlu0 %v1095, 32
        %v1143 = vpop.permute.xlu0 %1142
        %v1160 = vmul.f32 %v1064, %v1113
        %v1161 = vmul.f32 %v1065, %v1115
        %v1162 = vmul.f32 %v1066, %v1117
        %v1163 = vmul.f32 %v1067, %v1119
        %v1164 = vmul.f32 %v1068, %v1121
        %v1165 = vmul.f32 %v1069, %v1123
        %v1166 = vmul.f32 %v1070, %v1125
        %v1167 = vmul.f32 %v1071, %v1127
        %v1168 = vmul.f32 %v1072, %v1129
        %v1169 = vmul.f32 %v1073, %v1131
        %v1170 = vmul.f32 %v1074, %v1133
        %v1171 = vmul.f32 %v1075, %v1135
        %v1172 = vmul.f32 %v1076, %v1137
        %v1173 = vmul.f32 %v1077, %v1139
        %v1174 = vmul.f32 %v1078, %v1141
        %v1175 = vmul.f32 %v1079, %v1143
        %1192 = vrot.lane.b32.xlu0 %v1160, 96
        %v1193 = vpop.permute.xlu0 %1192
        %1194 = vrot.lane.b32.xlu0 %v1161, 96
        %v1195 = vpop.permute.xlu0 %1194
        %1196 = vrot.lane.b32.xlu0 %v1162, 96
        %v1197 = vpop.permute.xlu0 %1196
        %1198 = vrot.lane.b32.xlu0 %v1163, 96
        %v1199 = vpop.permute.xlu0 %1198
        %1200 = vrot.lane.b32.xlu0 %v1164, 96
        %v1201 = vpop.permute.xlu0 %1200
        %1202 = vrot.lane.b32.xlu0 %v1165, 96
        %v1203 = vpop.permute.xlu0 %1202
        %1204 = vrot.lane.b32.xlu0 %v1166, 96
        %v1205 = vpop.permute.xlu0 %1204
        %1206 = vrot.lane.b32.xlu0 %v1167, 96
        %v1207 = vpop.permute.xlu0 %1206
        %1208 = vrot.lane.b32.xlu0 %v1168, 96
        %v1209 = vpop.permute.xlu0 %1208
        %1210 = vrot.lane.b32.xlu0 %v1169, 96
        %v1211 = vpop.permute.xlu0 %1210
        %1212 = vrot.lane.b32.xlu0 %v1170, 96
        %v1213 = vpop.permute.xlu0 %1212
        %1214 = vrot.lane.b32.xlu0 %v1171, 96
        %v1215 = vpop.permute.xlu0 %1214
        %1216 = vrot.lane.b32.xlu0 %v1172, 96
        %v1217 = vpop.permute.xlu0 %1216
        %1218 = vrot.lane.b32.xlu0 %v1173, 96
        %v1219 = vpop.permute.xlu0 %1218
        %1220 = vrot.lane.b32.xlu0 %v1174, 96
        %v1221 = vpop.permute.xlu0 %1220
        %1222 = vrot.lane.b32.xlu0 %v1175, 96
        %v1223 = vpop.permute.xlu0 %1222
        %v1240 = vadd.f32 %v778, %v1193
        %v1241 = vadd.f32 %v781, %v1195
        %v1242 = vadd.f32 %v786, %v1197
        %v1243 = vadd.f32 %v789, %v1199
        %v1244 = vadd.f32 %v794, %v1201
        %v1245 = vadd.f32 %v797, %v1203
        %v1246 = vadd.f32 %v802, %v1205
        %v1247 = vadd.f32 %v805, %v1207
        %v1248 = vadd.f32 %v810, %v1209
        %v1249 = vadd.f32 %v813, %v1211
        %v1250 = vadd.f32 %v818, %v1213
        %v1251 = vadd.f32 %v821, %v1215
        %v1252 = vadd.f32 %v826, %v1217
        %v1253 = vadd.f32 %v829, %v1219
        %v1254 = vadd.f32 %v834, %v1221
        %v1255 = vadd.f32 %v837, %v1223
        %v1256 = vpack.c.bf16 %v1241, %v1240
        %v1257 = vpack.c.bf16 %v1243, %v1242
        %v1258 = vpack.c.bf16 %v1245, %v1244
        %v1259 = vpack.c.bf16 %v1247, %v1246
        %v1260 = vpack.c.bf16 %v1249, %v1248
        %v1261 = vpack.c.bf16 %v1251, %v1250
        %v1262 = vpack.c.bf16 %v1253, %v1252
        %v1263 = vpack.c.bf16 %v1255, %v1254
        %v1264 = vld [vmem:[%s6] sm:$0xf]
        %v1265 = vld [vmem:[%s6 + $0x4] sm:$0xf]
        %v1266 = vld [vmem:[%s6 + $0x8] sm:$0xf]
        %v1267 = vld [vmem:[%s6 + $0xc] sm:$0xf]
        %v1268 = vld [vmem:[%s7] sm:$0x1]
        %v1270 = vlaneseq
        %v1271 = vshrl.u32 %v1270, 7
        %v1272 = vsub.s32 0, %v1271
        %v1273 = vrot.slane %v1268, %v1272
        %v1279 = vunpack.c.l.b16 %v1264
        %v1280 = vunpack.c.l.b16 %v1265
        %v1281 = vunpack.c.l.b16 %v1266
        %v1282 = vunpack.c.l.b16 %v1267
        %v1283 = vpack.c.b16 %v1280, %v1279
        %v1284 = vpack.c.b16 %v1282, %v1281
        %vm1287 = vcmask 261120
        %v1289 = vsel %vm1287, %v1256, 0
        %v1292 = vsel %vm1287, %v1257, 0
        %v1295 = vsel %vm1287, %v1258, 0
        %v1298 = vsel %vm1287, %v1259, 0
        %v1301 = vsel %vm1287, %v1260, 0
        %v1304 = vsel %vm1287, %v1261, 0
        %v1307 = vsel %vm1287, %v1262, 0
        %v1310 = vsel %vm1287, %v1263, 0
        %1312 = vmatprep.subr.bf16.mxu0 0
        %1313 = vmatpush1.bf16.msra.mxu0 %v1283
        %1314 = vmatprep.subr.bf16.mxu0 0
        %1315 = vmatpush1.bf16.msra.mxu0 %v1284
        %1316 = vmatprep.subr.bf16.mxu0 0
        %1317 = vmatpush1.bf16.msra.mxu0 0
        %1318 = vmatprep.subr.bf16.mxu0 0
        %1319 = vmatpush1.bf16.msra.mxu0 0
        %1320 = vmatprep.subr.bf16.mxu0 0
        %1321 = vmatpush1.bf16.msra.mxu0 0
        %1322 = vmatprep.subr.bf16.mxu0 0
        %1323 = vmatpush1.bf16.msra.mxu0 0
        %1324 = vmatprep.subr.bf16.mxu0 0
        %1325 = vmatpush1.bf16.msra.mxu0 0
        %1326 = vmatprep.subr.bf16.mxu0 0
        %1327 = vmatpush1.bf16.msra.mxu0 0
        %1328 = vmatprep.subr.bf16.mxu0 0
        %1329 = vmatpush1.bf16.msra.mxu0 0
        %1330 = vmatprep.subr.bf16.mxu0 0
        %1331 = vmatpush1.bf16.msra.mxu0 0
        %1332 = vmatprep.subr.bf16.mxu0 0
        %1333 = vmatpush1.bf16.msra.mxu0 0
        %1334 = vmatprep.subr.bf16.mxu0 0
        %1335 = vmatpush1.bf16.msra.mxu0 0
        %1336 = vmatprep.subr.bf16.mxu0 0
        %1337 = vmatpush1.bf16.msra.mxu0 0
        %1338 = vmatprep.subr.bf16.mxu0 0
        %1339 = vmatpush1.bf16.msra.mxu0 0
        %1340 = vmatprep.subr.bf16.mxu0 0
        %1341 = vmatpush1.bf16.msra.mxu0 0
        %1342 = vmatprep.subr.bf16.mxu0 0
        %1343 = vmatpush1.bf16.msra.mxu0 0
        %1344 = vmatprep.mubr.bf16.mxu0 0
        %1345 = vmatmul.mubr.bf16.gmra.mrb[0].mxu0 %v1289
        %v1346 = vpop.f32.mrb[0].mxu0
        %v1347 = vadd.f32 %v1273, %v1346
        %v1348 = vpop.f32.mrb[0].mxu0
        %v1349 = vpop.f32.mrb[0].mxu0
        %v1350 = vadd.f32 %v1273, %v1349
        %v1351 = vpop.f32.mrb[0].mxu0
        %1352 = vmatprep.mubr.bf16.mxu0 0
        %1353 = vmatmul.mubr.bf16.gmra.mrb[0].mxu0 %v1292
        %v1354 = vpop.f32.mrb[0].mxu0
        %v1355 = vadd.f32 %v1273, %v1354
        %v1356 = vpop.f32.mrb[0].mxu0
        %v1357 = vpop.f32.mrb[0].mxu0
        %v1358 = vadd.f32 %v1273, %v1357
        %v1359 = vpop.f32.mrb[0].mxu0
        %1360 = vmatprep.mubr.bf16.mxu0 0
        %1361 = vmatmul.mubr.bf16.gmra.mrb[0].mxu0 %v1295
        %v1362 = vpop.f32.mrb[0].mxu0
        %v1363 = vadd.f32 %v1273, %v1362
        %v1364 = vpop.f32.mrb[0].mxu0
        %v1365 = vpop.f32.mrb[0].mxu0
        %v1366 = vadd.f32 %v1273, %v1365
        %v1367 = vpop.f32.mrb[0].mxu0
        %1368 = vmatprep.mubr.bf16.mxu0 0
        %1369 = vmatmul.mubr.bf16.gmra.mrb[0].mxu0 %v1298
        %v1370 = vpop.f32.mrb[0].mxu0
        %v1371 = vadd.f32 %v1273, %v1370
        %v1372 = vpop.f32.mrb[0].mxu0
        %v1373 = vpop.f32.mrb[0].mxu0
        %v1374 = vadd.f32 %v1273, %v1373
        %v1375 = vpop.f32.mrb[0].mxu0
        %1376 = vmatprep.mubr.bf16.mxu0 0
        %1377 = vmatmul.mubr.bf16.gmra.mrb[0].mxu0 %v1301
        %v1378 = vpop.f32.mrb[0].mxu0
        %v1379 = vadd.f32 %v1273, %v1378
        %v1380 = vpop.f32.mrb[0].mxu0
        %v1381 = vpop.f32.mrb[0].mxu0
        %v1382 = vadd.f32 %v1273, %v1381
        %v1383 = vpop.f32.mrb[0].mxu0
        %1384 = vmatprep.mubr.bf16.mxu0 0
        %1385 = vmatmul.mubr.bf16.gmra.mrb[0].mxu0 %v1304
        %v1386 = vpop.f32.mrb[0].mxu0
        %v1387 = vadd.f32 %v1273, %v1386
        %v1388 = vpop.f32.mrb[0].mxu0
        %v1389 = vpop.f32.mrb[0].mxu0
        %v1390 = vadd.f32 %v1273, %v1389
        %v1391 = vpop.f32.mrb[0].mxu0
        %1392 = vmatprep.mubr.bf16.mxu0 0
        %1393 = vmatmul.mubr.bf16.gmra.mrb[0].mxu0 %v1307
        %v1394 = vpop.f32.mrb[0].mxu0
        %v1395 = vadd.f32 %v1273, %v1394
        %v1396 = vpop.f32.mrb[0].mxu0
        %v1397 = vpop.f32.mrb[0].mxu0
        %v1398 = vadd.f32 %v1273, %v1397
        %v1399 = vpop.f32.mrb[0].mxu0
        %1400 = vmatprep.mubr.bf16.mxu0 0
        %1401 = vmatmul.mubr.bf16.gmra.mrb[0].mxu0 %v1310
        %v1402 = vpop.f32.mrb[0].mxu0
        %v1403 = vadd.f32 %v1273, %v1402
        %v1404 = vpop.f32.mrb[0].mxu0
        %v1405 = vpop.f32.mrb[0].mxu0
        %v1406 = vadd.f32 %v1273, %v1405
        %v1407 = vpop.f32.mrb[0].mxu0
        %1408 = vdwg.mxu0
        %v1409 = vmax.f32 %v1347, 0.0
        %v1410 = vmax.f32 %v1350, 0.0
        %v1411 = vmax.f32 %v1355, 0.0
        %v1412 = vmax.f32 %v1358, 0.0
        %v1413 = vmax.f32 %v1363, 0.0
        %v1414 = vmax.f32 %v1366, 0.0
        %v1415 = vmax.f32 %v1371, 0.0
        %v1416 = vmax.f32 %v1374, 0.0
        %v1417 = vmax.f32 %v1379, 0.0
        %v1418 = vmax.f32 %v1382, 0.0
        %v1419 = vmax.f32 %v1387, 0.0
        %v1420 = vmax.f32 %v1390, 0.0
        %v1421 = vmax.f32 %v1395, 0.0
        %v1422 = vmax.f32 %v1398, 0.0
        %v1423 = vmax.f32 %v1403, 0.0
        %v1424 = vmax.f32 %v1406, 0.0
        %v1425 = vpack.c.bf16 %v1410, %v1409
        %v1426 = vpack.c.bf16 %v1412, %v1411
        %v1427 = vpack.c.bf16 %v1414, %v1413
        %v1428 = vpack.c.bf16 %v1416, %v1415
        %v1429 = vpack.c.bf16 %v1418, %v1417
        %v1430 = vpack.c.bf16 %v1420, %v1419
        %v1431 = vpack.c.bf16 %v1422, %v1421
        %v1432 = vpack.c.bf16 %v1424, %v1423
        %v1433 = vld [vmem:[%s8] sm:$0xf]
        %v1434 = vld [vmem:[%s8 + $0x4] sm:$0xf]
        %v1435 = vld [vmem:[%s8 + $0x8] sm:$0xf]
        %v1436 = vld [vmem:[%s8 + $0xc] sm:$0xf]
        %v1437 = vld [vmem:[%s8 + $0x10] sm:$0xf]
        %v1438 = vld [vmem:[%s8 + $0x14] sm:$0xf]
        %v1439 = vld [vmem:[%s8 + $0x18] sm:$0xf]
        %v1440 = vld [vmem:[%s8 + $0x1c] sm:$0xf]
        %v1441 = vld [vmem:[%s9] sm:$0x1]
        %v1443 = vlaneseq
        %v1444 = vshrl.u32 %v1443, 7
        %v1445 = vsub.s32 0, %v1444
        %v1446 = vrot.slane %v1441, %v1445
        %v1456 = vunpack.c.l.b16 %v1433
        %v1457 = vunpack.c.l.b16 %v1434
        %v1458 = vunpack.c.l.b16 %v1435
        %v1459 = vunpack.c.l.b16 %v1436
        %v1460 = vunpack.c.l.b16 %v1437
        %v1461 = vunpack.c.l.b16 %v1438
        %v1462 = vunpack.c.l.b16 %v1439
        %v1463 = vunpack.c.l.b16 %v1440
        %v1464 = vpack.c.b16 %v1457, %v1456
        %v1465 = vpack.c.b16 %v1459, %v1458
        %v1466 = vpack.c.b16 %v1461, %v1460
        %v1467 = vpack.c.b16 %v1463, %v1462
        %v1473 = vsel %vm718, %v1425, 0
        %v1476 = vsel %vm718, %v1426, 0
        %v1479 = vsel %vm718, %v1427, 0
        %v1482 = vsel %vm718, %v1428, 0
        %v1485 = vsel %vm718, %v1429, 0
        %v1488 = vsel %vm718, %v1430, 0
        %v1491 = vsel %vm718, %v1431, 0
        %v1494 = vsel %vm718, %v1432, 0
        %1496 = vmatprep.subr.bf16.mxu0 0
        %1497 = vmatpush1.bf16.msra.mxu0 %v1464
        %1498 = vmatprep.subr.bf16.mxu0 0
        %1499 = vmatpush1.bf16.msra.mxu0 %v1465
        %1500 = vmatprep.subr.bf16.mxu0 0
        %1501 = vmatpush1.bf16.msra.mxu0 %v1466
        %1502 = vmatprep.subr.bf16.mxu0 0
        %1503 = vmatpush1.bf16.msra.mxu0 %v1467
        %1504 = vmatprep.subr.bf16.mxu0 0
        %1505 = vmatpush1.bf16.msra.mxu0 0
        %1506 = vmatprep.subr.bf16.mxu0 0
        %1507 = vmatpush1.bf16.msra.mxu0 0
        %1508 = vmatprep.subr.bf16.mxu0 0
        %1509 = vmatpush1.bf16.msra.mxu0 0
        %1510 = vmatprep.subr.bf16.mxu0 0
        %1511 = vmatpush1.bf16.msra.mxu0 0
        %1512 = vmatprep.subr.bf16.mxu0 0
        %1513 = vmatpush1.bf16.msra.mxu0 0
        %1514 = vmatprep.subr.bf16.mxu0 0
        %1515 = vmatpush1.bf16.msra.mxu0 0
        %1516 = vmatprep.subr.bf16.mxu0 0
        %1517 = vmatpush1.bf16.msra.mxu0 0
        %1518 = vmatprep.subr.bf16.mxu0 0
        %1519 = vmatpush1.bf16.msra.mxu0 0
        %1520 = vmatprep.subr.bf16.mxu0 0
        %1521 = vmatpush1.bf16.msra.mxu0 0
        %1522 = vmatprep.subr.bf16.mxu0 0
        %1523 = vmatpush1.bf16.msra.mxu0 0
        %1524 = vmatprep.subr.bf16.mxu0 0
        %1525 = vmatpush1.bf16.msra.mxu0 0
        %1526 = vmatprep.subr.bf16.mxu0 0
        %1527 = vmatpush1.bf16.msra.mxu0 0
        %1528 = vmatprep.mubr.bf16.mxu0 0
        %1529 = vmatmul.mubr.bf16.gmra.mrb[0].mxu0 %v1473
        %v1530 = vpop.f32.mrb[0].mxu0
        %v1531 = vadd.f32 %v1446, %v1530
        %v1532 = vpop.f32.mrb[0].mxu0
        %v1533 = vpop.f32.mrb[0].mxu0
        %v1534 = vadd.f32 %v1446, %v1533
        %v1535 = vpop.f32.mrb[0].mxu0
        %1536 = vmatprep.mubr.bf16.mxu0 0
        %1537 = vmatmul.mubr.bf16.gmra.mrb[0].mxu0 %v1476
        %v1538 = vpop.f32.mrb[0].mxu0
        %v1539 = vadd.f32 %v1446, %v1538
        %v1540 = vpop.f32.mrb[0].mxu0
        %v1541 = vpop.f32.mrb[0].mxu0
        %v1542 = vadd.f32 %v1446, %v1541
        %v1543 = vpop.f32.mrb[0].mxu0
        %1544 = vmatprep.mubr.bf16.mxu0 0
        %1545 = vmatmul.mubr.bf16.gmra.mrb[0].mxu0 %v1479
        %v1546 = vpop.f32.mrb[0].mxu0
        %v1547 = vadd.f32 %v1446, %v1546
        %v1548 = vpop.f32.mrb[0].mxu0
        %v1549 = vpop.f32.mrb[0].mxu0
        %v1550 = vadd.f32 %v1446, %v1549
        %v1551 = vpop.f32.mrb[0].mxu0
        %1552 = vmatprep.mubr.bf16.mxu0 0
        %1553 = vmatmul.mubr.bf16.gmra.mrb[0].mxu0 %v1482
        %v1554 = vpop.f32.mrb[0].mxu0
        %v1555 = vadd.f32 %v1446, %v1554
        %v1556 = vpop.f32.mrb[0].mxu0
        %v1557 = vpop.f32.mrb[0].mxu0
        %v1558 = vadd.f32 %v1446, %v1557
        %v1559 = vpop.f32.mrb[0].mxu0
        %1560 = vmatprep.mubr.bf16.mxu0 0
        %1561 = vmatmul.mubr.bf16.gmra.mrb[0].mxu0 %v1485
        %v1562 = vpop.f32.mrb[0].mxu0
        %v1563 = vadd.f32 %v1446, %v1562
        %v1564 = vpop.f32.mrb[0].mxu0
        %v1565 = vpop.f32.mrb[0].mxu0
        %v1566 = vadd.f32 %v1446, %v1565
        %v1567 = vpop.f32.mrb[0].mxu0
        %1568 = vmatprep.mubr.bf16.mxu0 0
        %1569 = vmatmul.mubr.bf16.gmra.mrb[0].mxu0 %v1488
        %v1570 = vpop.f32.mrb[0].mxu0
        %v1571 = vadd.f32 %v1446, %v1570
        %v1572 = vpop.f32.mrb[0].mxu0
        %v1573 = vpop.f32.mrb[0].mxu0
        %v1574 = vadd.f32 %v1446, %v1573
        %v1575 = vpop.f32.mrb[0].mxu0
        %1576 = vmatprep.mubr.bf16.mxu0 0
        %1577 = vmatmul.mubr.bf16.gmra.mrb[0].mxu0 %v1491
        %v1578 = vpop.f32.mrb[0].mxu0
        %v1579 = vadd.f32 %v1446, %v1578
        %v1580 = vpop.f32.mrb[0].mxu0
        %v1581 = vpop.f32.mrb[0].mxu0
        %v1582 = vadd.f32 %v1446, %v1581
        %v1583 = vpop.f32.mrb[0].mxu0
        %1584 = vmatprep.mubr.bf16.mxu0 0
        %1585 = vmatmul.mubr.bf16.gmra.mrb[0].mxu0 %v1494
        %v1586 = vpop.f32.mrb[0].mxu0
        %v1587 = vadd.f32 %v1446, %v1586
        %v1588 = vpop.f32.mrb[0].mxu0
        %v1589 = vpop.f32.mrb[0].mxu0
        %v1590 = vadd.f32 %v1446, %v1589
        %v1591 = vpop.f32.mrb[0].mxu0
        %1592 = vdwg.mxu0
        %1609 = vrot.lane.b32.xlu0 %v1240, 64
        %v1610 = vpop.permute.xlu0 %1609
        %1611 = vrot.lane.b32.xlu0 %v1241, 64
        %v1612 = vpop.permute.xlu0 %1611
        %1613 = vrot.lane.b32.xlu0 %v1242, 64
        %v1614 = vpop.permute.xlu0 %1613
        %1615 = vrot.lane.b32.xlu0 %v1243, 64
        %v1616 = vpop.permute.xlu0 %1615
        %1617 = vrot.lane.b32.xlu0 %v1244, 64
        %v1618 = vpop.permute.xlu0 %1617
        %1619 = vrot.lane.b32.xlu0 %v1245, 64
        %v1620 = vpop.permute.xlu0 %1619
        %1621 = vrot.lane.b32.xlu0 %v1246, 64
        %v1622 = vpop.permute.xlu0 %1621
        %1623 = vrot.lane.b32.xlu0 %v1247, 64
        %v1624 = vpop.permute.xlu0 %1623
        %1625 = vrot.lane.b32.xlu0 %v1248, 64
        %v1626 = vpop.permute.xlu0 %1625
        %1627 = vrot.lane.b32.xlu0 %v1249, 64
        %v1628 = vpop.permute.xlu0 %1627
        %1629 = vrot.lane.b32.xlu0 %v1250, 64
        %v1630 = vpop.permute.xlu0 %1629
        %1631 = vrot.lane.b32.xlu0 %v1251, 64
        %v1632 = vpop.permute.xlu0 %1631
        %1633 = vrot.lane.b32.xlu0 %v1252, 64
        %v1634 = vpop.permute.xlu0 %1633
        %1635 = vrot.lane.b32.xlu0 %v1253, 64
        %v1636 = vpop.permute.xlu0 %1635
        %1637 = vrot.lane.b32.xlu0 %v1254, 64
        %v1638 = vpop.permute.xlu0 %1637
        %1639 = vrot.lane.b32.xlu0 %v1255, 64
        %v1640 = vpop.permute.xlu0 %1639
        %v1657 = vsel %vm1287, %v778, %v1064
        %v1658 = vsel %vm1287, %v781, %v1065
        %v1659 = vsel %vm1287, %v786, %v1066
        %v1660 = vsel %vm1287, %v789, %v1067
        %v1661 = vsel %vm1287, %v794, %v1068
        %v1662 = vsel %vm1287, %v797, %v1069
        %v1663 = vsel %vm1287, %v802, %v1070
        %v1664 = vsel %vm1287, %v805, %v1071
        %v1665 = vsel %vm1287, %v810, %v1072
        %v1666 = vsel %vm1287, %v813, %v1073
        %v1667 = vsel %vm1287, %v818, %v1074
        %v1668 = vsel %vm1287, %v821, %v1075
        %v1669 = vsel %vm1287, %v826, %v1076
        %v1670 = vsel %vm1287, %v829, %v1077
        %v1671 = vsel %vm1287, %v834, %v1078
        %v1672 = vsel %vm1287, %v837, %v1079
        %v1673 = vsel %vm718, %v1657, %v1610
        %v1674 = vsel %vm718, %v1658, %v1612
        %v1675 = vsel %vm718, %v1659, %v1614
        %v1676 = vsel %vm718, %v1660, %v1616
        %v1677 = vsel %vm718, %v1661, %v1618
        %v1678 = vsel %vm718, %v1662, %v1620
        %v1679 = vsel %vm718, %v1663, %v1622
        %v1680 = vsel %vm718, %v1664, %v1624
        %v1681 = vsel %vm718, %v1665, %v1626
        %v1682 = vsel %vm718, %v1666, %v1628
        %v1683 = vsel %vm718, %v1667, %v1630
        %v1684 = vsel %vm718, %v1668, %v1632
        %v1685 = vsel %vm718, %v1669, %v1634
        %v1686 = vsel %vm718, %v1670, %v1636
        %v1687 = vsel %vm718, %v1671, %v1638
        %v1688 = vsel %vm718, %v1672, %v1640
        %vm1689 = vcmask 785408
        %v1690 = vsel %vm1689, %v1673, 0.0
        %v1691 = vsel %vm1689, %v1674, 0.0
        %v1692 = vsel %vm1689, %v1675, 0.0
        %v1693 = vsel %vm1689, %v1676, 0.0
        %v1694 = vsel %vm1689, %v1677, 0.0
        %v1695 = vsel %vm1689, %v1678, 0.0
        %v1696 = vsel %vm1689, %v1679, 0.0
        %v1697 = vsel %vm1689, %v1680, 0.0
        %v1698 = vsel %vm1689, %v1681, 0.0
        %v1699 = vsel %vm1689, %v1682, 0.0
        %v1700 = vsel %vm1689, %v1683, 0.0
        %v1701 = vsel %vm1689, %v1684, 0.0
        %v1702 = vsel %vm1689, %v1685, 0.0
        %v1703 = vsel %vm1689, %v1686, 0.0
        %v1704 = vsel %vm1689, %v1687, 0.0
        %v1705 = vsel %vm1689, %v1688, 0.0
        %1706 = vst [vmem:[%s400] sm:$0xff] %v1690
        %1707 = vst [vmem:[%s400 + $0x8] sm:$0xff] %v1691
        %1708 = vst [vmem:[%s400 + $0x10] sm:$0xff] %v1692
        %1709 = vst [vmem:[%s400 + $0x18] sm:$0xff] %v1693
        %1710 = vst [vmem:[%s400 + $0x20] sm:$0xff] %v1694
        %1711 = vst [vmem:[%s400 + $0x28] sm:$0xff] %v1695
        %1712 = vst [vmem:[%s400 + $0x30] sm:$0xff] %v1696
        %1713 = vst [vmem:[%s400 + $0x38] sm:$0xff] %v1697
        %1714 = vst [vmem:[%s400 + $0x40] sm:$0xff] %v1698
        %1715 = vst [vmem:[%s400 + $0x48] sm:$0xff] %v1699
        %1716 = vst [vmem:[%s400 + $0x50] sm:$0xff] %v1700
        %1717 = vst [vmem:[%s400 + $0x58] sm:$0xff] %v1701
        %1718 = vst [vmem:[%s400 + $0x60] sm:$0xff] %v1702
        %1719 = vst [vmem:[%s400 + $0x68] sm:$0xff] %v1703
        %1720 = vst [vmem:[%s400 + $0x70] sm:$0xff] %v1704
        %1721 = vst [vmem:[%s400 + $0x78] sm:$0xff] %v1705
        %1722 = vst [vmem:[%s407] sm:$0xff] %v1531
        %1723 = vst [vmem:[%s407 + $0x8] sm:$0xff] %v1534
        %1724 = vst [vmem:[%s407 + $0x10] sm:$0xff] %v1539
        %1725 = vst [vmem:[%s407 + $0x18] sm:$0xff] %v1542
        %1726 = vst [vmem:[%s407 + $0x20] sm:$0xff] %v1547
        %1727 = vst [vmem:[%s407 + $0x28] sm:$0xff] %v1550
        %1728 = vst [vmem:[%s407 + $0x30] sm:$0xff] %v1555
        %1729 = vst [vmem:[%s407 + $0x38] sm:$0xff] %v1558
        %1730 = vst [vmem:[%s407 + $0x40] sm:$0xff] %v1563
        %1731 = vst [vmem:[%s407 + $0x48] sm:$0xff] %v1566
        %1732 = vst [vmem:[%s407 + $0x50] sm:$0xff] %v1571
        %1733 = vst [vmem:[%s407 + $0x58] sm:$0xff] %v1574
        %1734 = vst [vmem:[%s407 + $0x60] sm:$0xff] %v1579
        %1735 = vst [vmem:[%s407 + $0x68] sm:$0xff] %v1582
        %1736 = vst [vmem:[%s407 + $0x70] sm:$0xff] %v1587
        %1737 = vst [vmem:[%s407 + $0x78] sm:$0xff] %v1590
        %s1738 = sand.u32 %s257, 1
        %s1739 = scalar_lea.sflag [#allocation3], %s1738
        %s1740 = sand.u32 %s257, 1
        %s1741 = smul.addr %s1740, 128
        %s1742 = scalar_lea.vmem [#allocation2], %s1741
        %s1743 = sand.u32 %s283, 1
        %s1744 = scalar_lea.sflag [#allocation5], %s1743
        %s1745 = sand.u32 %s283, 1
        %s1746 = smul.addr %s1745, 128
        %s1747 = scalar_lea.vmem [#allocation4], %s1746
        // Predicated region
        $region61: #{tpu_custom_call.1} parent=59 // pred_check
          %p1748 = pneg %p267
        $region62: #{tpu_custom_call.1} parent=59 // pred_check_branch
          %1750 = sbr.rel (%p1748) target = $region64
        $region63: #{tpu_custom_call.1} parent=59 // pred_region
          %s1751 = smul.u32 16, %s29
          %s1753 = ssub.s32 2048, 2048
          %1754 = vsyncadd %s1739, %s1753
          %s1755 = smul.addr %s1751, 128
          %s1756 = scalar_lea.hbm %s10, %s1755
          %s1757 = sshll.u32 %s1742, 4
          %s1758 = int_to_ptr.vmem [resolvable:$true] %s1757
          %1763 = dma.vmem_to_hbm [thread:$0]  %s1758, 2048, %s1756, %s1739, 128, 128, 8
        $region64: #{tpu_custom_call.1} parent=59 // pred_fallthru
          _
        // Predicated region
        $region65: #{tpu_custom_call.1} parent=59 // pred_check
          %p1764 = pneg %p293
        $region66: #{tpu_custom_call.1} parent=59 // pred_check_branch
          %1766 = sbr.rel (%p1764) target = $region68
        $region67: #{tpu_custom_call.1} parent=59 // pred_region
          %s1767 = smul.u32 16, %s29
          %s1769 = ssub.s32 2048, 2048
          %1770 = vsyncadd %s1744, %s1769
          %s1771 = smul.addr %s1767, 128
          %s1772 = scalar_lea.hbm %s11, %s1771
          %s1773 = sshll.u32 %s1747, 4
          %s1774 = int_to_ptr.vmem [resolvable:$true] %s1773
          %1779 = dma.vmem_to_hbm [thread:$0]  %s1774, 2048, %s1772, %s1744, 128, 128, 8
        $region68: #{tpu_custom_call.1} parent=59 // pred_fallthru
          _
      $region60: #{tpu_custom_call.1} parent=5 // pred_fallthru
        _
      %p1780 = scmp.le.s32.totalorder 2, %s24
      // Predicated region
      $region69: #{tpu_custom_call.1} parent=5 // pred_check
        %p1781 = pneg %p1780
      $region70: #{tpu_custom_call.1} parent=5 // pred_check_branch
        %1783 = sbr.rel (%p1781) target = $region72
      $region71: #{tpu_custom_call.1} parent=5 // pred_region
        %s1784 = ssub.s32 %s24, 2
        // Predicated region
        $region73: #{tpu_custom_call.1} parent=71 // pred_check
          %p1785 = pneg %p273
        $region74: #{tpu_custom_call.1} parent=71 // pred_check_branch
          %1787 = sbr.rel (%p1785) target = $region76
        $region75: #{tpu_custom_call.1} parent=71 // pred_region
          %s1788 = sand.u32 %s258, 1
          %s1789 = scalar_lea.sflag [#allocation3], %s1788
          %s1790 = sand.u32 %s258, 1
          %s1791 = smul.addr %s1790, 128
          %s1792 = scalar_lea.vmem [#allocation2], %s1791
          %1793 = dma.done %s1789, 2048
        $region76: #{tpu_custom_call.1} parent=71 // pred_fallthru
          _
        // Predicated region
        $region77: #{tpu_custom_call.1} parent=71 // pred_check
          %p1794 = pneg %p299
        $region78: #{tpu_custom_call.1} parent=71 // pred_check_branch
          %1796 = sbr.rel (%p1794) target = $region80
        $region79: #{tpu_custom_call.1} parent=71 // pred_region
          %s1797 = sand.u32 %s284, 1
          %s1798 = scalar_lea.sflag [#allocation5], %s1797
          %s1799 = sand.u32 %s284, 1
          %s1800 = smul.addr %s1799, 128
          %s1801 = scalar_lea.vmem [#allocation4], %s1800
          %1802 = dma.done %s1798, 2048
        $region80: #{tpu_custom_call.1} parent=71 // pred_fallthru
          _
      $region72: #{tpu_custom_call.1} parent=5 // pred_fallthru
        _
    $region6: #{tpu_custom_call.1} parent=1 // loop_footer
      %s28 = sadd.s32 1, %s24
    $region7: #{tpu_custom_call.1} parent=1 // loop_footer_branch
      %23 = sbr.rel target = $region3
    $region8: #{tpu_custom_call.1} parent=1 // loop_exit
      _
    %1803 = vsyncpa [#allocation3], 1
    %s1804 = scalar_lea.sflag [#allocation3], 1
    %1805 = vsyncpa %s1804, 1
    %1806 = vsyncpa [#allocation5], 1
    %s1807 = scalar_lea.sflag [#allocation5], 1
    %1808 = vsyncpa %s1807, 1

</llo_original>
